<compile_context>
chip_gen: v5e
topology: v5e:2x2
jax: 0.10.0
libtpu: 0.0.40
codegen_flags: <defaults>
</compile_context>

<pallas_src>
import jax
import jax.numpy as jnp
from jax import lax
from jax.experimental import pallas as pl
from jax.experimental.pallas import tpu as pltpu

LANES = 128      # outputs are viewed as lane-dense rows of 128
SUBLANES = 8
CHUNK = 8        # output rows (of 128 lanes) processed per inner kernel step


def _cdiv(a, b):
    return (a + b - 1) // b


def _round_up(a, b):
    return _cdiv(a, b) * b


def poisson_forward_kernel(z_ref, rate_ref, eps_ref, o_ref):
    # z_ref:    (TR*128, K)  natural [M, K] slab for this grid step (K on lanes;
    #                        lane padding exists only in VMEM, HBM traffic = 1 pass)
    # rate_ref: (1, K)       exp(rate) row, VMEM-resident across grid steps
    # eps_ref:  (TR, 128)    N(0,1) noise, lane-dense
    # o_ref:    (TR, 128)    x = eps * sqrt(mu) + mu, lane-dense unmasked stores
    tr, lanes = o_ref.shape
    k = z_ref.shape[-1]
    rate = rate_ref[...].astype(jnp.float32)            # (1, K), hoisted once

    def body(c, carry):
        # Chunked over CHUNK output rows so the multiply/reduce never builds a
        # tile-sized f32 temporary in VMEM (keeps large block_rows spill-free).
        r0 = pl.multiple_of(c * CHUNK, CHUNK)
        z0 = pl.multiple_of(c * (CHUNK * lanes), CHUNK * lanes)

        z = z_ref[pl.ds(z0, CHUNK * lanes), :].astype(jnp.float32)   # (CHUNK*128, K)
        z = z.reshape(CHUNK, lanes, k)        # free: splits the major (sublane) dim

        # K-contraction over the lane axis on VPU + XLU (XLU otherwise idle).
        # The MXU is deliberately not used: K x 1 matvec, kernel is HBM-bound.
        mu = jnp.sum(z * rate[None, :, :], axis=-1)                  # (CHUNK, 128)

        # z >= 0 (state posteriors), so mu >= 0.  The clamp guards sqrt against
        # roundoff and against garbage rows of a partial (masked) last z block.
        mu = jnp.maximum(mu, 0.0)
        sigma = jnp.sqrt(mu)

        eps = eps_ref[pl.ds(r0, CHUNK), :].astype(jnp.float32)
        o_ref[pl.ds(r0, CHUNK), :] = (eps * sigma + mu).astype(o_ref.dtype)
        return carry

    lax.fori_loop(0, tr // CHUNK, body, 0)


def poisson_forward(z, rate_param, eps, *, block_rows=256):
    """z: [B, L, K] (non-negative), rate_param: [K, 1], eps: [B, L] -> x: [B, L]."""
    B, L, K = z.shape
    M = B * L

    # ---- tiny [K, 1] parameter path (plain JAX) -----------------------------
    # torch.sort defaults to dim=-1, which has size 1 on a [K, 1] tensor, so the
    # sort is a no-op; kept literally for exact semantic parity with the module.
    rate = jnp.sort(jnp.exp(rate_param.astype(jnp.float32)), axis=-1)    # [K, 1]
    rate_row = rate.reshape(1, K)                                        # [1, K]

    # ---- z stays in its natural [M, K] layout: no wrapper-side repack -------
    z2 = z.reshape(M, K)                      # free reshape of contiguous data

    rows = _cdiv(M, LANES)                    # lane-dense output rows of 128
    # Tile rows per grid step: as large as the VMEM budget allows, but keep
    # >= 2 grid steps for mid-size inputs (pipelining + v7x's 2 TensorCores).
    block_rows = max(SUBLANES, _round_up(block_rows, SUBLANES))
    tr = max(SUBLANES, min(block_rows, _round_up(_cdiv(rows, 2), SUBLANES)))
    rows_alloc = _round_up(rows, tr)          # out/eps padded rows (exact grid)
    grid = (rows_alloc // tr,)

    # eps / out are tiny (1/K of the z traffic): pad eps to the lane-dense slab.
    eps_pad = jnp.pad(eps.reshape(M), (0, rows_alloc * LANES - M))
    eps_pad = eps_pad.reshape(rows_alloc, LANES)

    # Only if the whole input is smaller than one z tile, pad z (tiny inputs
    # only; large inputs rely on the masked partial last block instead).
    if M < tr * LANES:
        z2 = jnp.pad(z2, ((0, tr * LANES - M), (0, 0)))

    out = pl.pallas_call(
        poisson_forward_kernel,
        out_shape=jax.ShapeDtypeStruct((rows_alloc, LANES), z.dtype),
        grid=grid,
        in_specs=[
            # z: (tr*128, K) blocks straight out of HBM (single pass of z).
            pl.BlockSpec((tr * LANES, K), lambda i: (i, 0)),
            pl.BlockSpec((1, K), lambda i: (0, 0)),        # resident across steps
            pl.BlockSpec((tr, LANES), lambda i: (i, 0)),
        ],
        out_specs=pl.BlockSpec((tr, LANES), lambda i: (i, 0)),
        compiler_params=pltpu.CompilerParams(
            dimension_semantics=("parallel",),   # shards steps across v7x's 2 TCs
            # tr=256: lane-padded z tile 16 MiB x 2 buffers + eps/out ~ 33 MiB;
            # 48 MiB leaves headroom and stays under v7x's 64 MiB physical VMEM.
            vmem_limit_bytes=48 * 1024 * 1024,
        ),
    )(z2, rate_row, eps_pad)

    return out.reshape(rows_alloc * LANES)[:M].reshape(B, L)


def _reference(z, rate_param, eps):
    rate = jnp.sort(jnp.exp(rate_param), axis=-1)         # no-op sort, as in torch
    mu = jnp.matmul(z.astype(jnp.float32), rate.astype(jnp.float32))
    return (eps[..., None] * jnp.sqrt(mu) + mu).squeeze(-1)


if __name__ == "__main__":
    # Module hyper-parameters.
    K = 32           # number of HMM states
    s, m = 0.1, 1.0  # uniform init bounds for the rate parameter

    key = jax.random.PRNGKey(0)
    k_rate, k_z, k_eps, k_z2, k_eps2 = jax.random.split(key, 5)

    # Deterministic parameter init: nn.init.uniform_(torch.empty(K, 1), s, m)
    rate_param = jax.random.uniform(k_rate, (K, 1), jnp.float32, minval=s, maxval=m)

    # Small shape consistent with the module's forward signature.
    B, L = 2, 8
    z = jax.nn.softmax(jax.random.normal(k_z, (B, L, K), jnp.float32), axis=-1)
    eps = jax.random.normal(k_eps, (B, L), jnp.float32)   # training-mode noise

    x = poisson_forward(z, rate_param, eps)
    jax.block_until_ready(x)
    assert x.shape == (B, L)
    assert jnp.allclose(x, _reference(z, rate_param, eps), atol=1e-5, rtol=1e-4)

    # Larger shape exercising the multi-step grid and the masked partial last
    # z block (M not a multiple of the tile).
    B2, L2 = 3, 10_000
    z_big = jax.nn.softmax(jax.random.normal(k_z2, (B2, L2, K), jnp.float32), axis=-1)
    eps_big = jax.random.normal(k_eps2, (B2, L2), jnp.float32)
    x_big = poisson_forward(z_big, rate_param, eps_big)
    jax.block_until_ready(x_big)
    assert x_big.shape == (B2, L2)
    assert jnp.allclose(x_big, _reference(z_big, rate_param, eps_big),
                        atol=1e-5, rtol=1e-4)

    print("KERNEL_OK")
</pallas_src>

<mosaic_0001>
module attributes {stable_mosaic.version = 11 : i64} {
  func.func @poisson_forward_kernel(%arg0: i32, %arg1: memref<1024x32xf32, #tpu.memory_space<vmem>>, %arg2: memref<1x32xf32, #tpu.memory_space<vmem>>, %arg3: memref<8x128xf32, #tpu.memory_space<vmem>>, %arg4: memref<8x128xf32, #tpu.memory_space<vmem>>) attributes {dimension_semantics = [#tpu.dimension_semantics<parallel>], iteration_bounds = array<i64: 1>, scalar_prefetch = 0 : i64, scratch_operands = 0 : i64, tpu.core_type = #tpu.core_type<tc>, window_params = [{transform_indices = @transform_0, window_bounds = array<i64: 1024, 32>}, {pipeline_mode = #tpu.pipeline_mode<synchronous>, transform_indices = @transform_1, window_bounds = array<i64: 1, 32>}, {transform_indices = @transform_2, window_bounds = array<i64: 8, 128>}, {transform_indices = @transform_3, window_bounds = array<i64: 8, 128>}]} {
    %c0 = arith.constant 0 : index
    %c0_0 = arith.constant 0 : index
    %0 = vector.load %arg2[%c0, %c0_0] : memref<1x32xf32, #tpu.memory_space<vmem>>, vector<1x32xf32>
    %c0_i32 = arith.constant 0 : i32
    %c8_i32 = arith.constant 8 : i32
    %1 = arith.muli %c0_i32, %c8_i32 : i32
    %2 = tpu.assume_multiple %1, 8 : i32
    %c1024_i32 = arith.constant 1024 : i32
    %3 = arith.muli %c0_i32, %c1024_i32 : i32
    %4 = tpu.assume_multiple %3, 1024 : i32
    %5 = arith.index_cast %4 : i32 to index
    %c0_1 = arith.constant 0 : index
    %6 = vector.load %arg1[%5, %c0_1] : memref<1024x32xf32, #tpu.memory_space<vmem>>, vector<1024x32xf32>
    %7 = vector.shape_cast %6 : vector<1024x32xf32> to vector<8x128x32xf32>
    %8 = vector.shape_cast %0 : vector<1x32xf32> to vector<1x1x32xf32>
    %9 = vector.broadcast %8 : vector<1x1x32xf32> to vector<8x128x32xf32>
    %10 = arith.mulf %7, %9 : vector<8x128x32xf32>
    %cst = arith.constant dense<0.000000e+00> : vector<8x128xf32>
    %11 = vector.multi_reduction <add>, %10, %cst [2] : vector<8x128x32xf32> to vector<8x128xf32>
    %cst_2 = arith.constant 0.000000e+00 : f32
    %12 = vector.broadcast %cst_2 : f32 to vector<8x128xf32>
    %13 = arith.maximumf %11, %12 : vector<8x128xf32>
    %14 = math.sqrt %13 : vector<8x128xf32>
    %15 = arith.index_cast %2 : i32 to index
    %c0_3 = arith.constant 0 : index
    %16 = vector.load %arg3[%15, %c0_3] : memref<8x128xf32, #tpu.memory_space<vmem>>, vector<8x128xf32>
    %17 = arith.mulf %16, %14 : vector<8x128xf32>
    %18 = arith.addf %17, %13 : vector<8x128xf32>
    %19 = arith.index_cast %2 : i32 to index
    %c0_4 = arith.constant 0 : index
    %20 = vector.load %arg4[%19, %c0_4] : memref<8x128xf32, #tpu.memory_space<vmem>>, vector<8x128xf32>
    tpu.vector_store %arg4[%19, %c0_4], %18 {strides = array<i32>} : memref<8x128xf32, #tpu.memory_space<vmem>>, vector<8x128xf32>,
    %c1_i32 = arith.constant 1 : i32
    return
  }
  func.func @transform_0(%arg0: i32) -> (i32, i32) {
    %c0_i32 = arith.constant 0 : i32
    %c0_i32_0 = arith.constant 0 : i32
    return %arg0, %c0_i32 : i32, i32
  }
  func.func @transform_1(%arg0: i32) -> (i32, i32) {
    %c0_i32 = arith.constant 0 : i32
    %c0_i32_0 = arith.constant 0 : i32
    %c0_i32_1 = arith.constant 0 : i32
    return %c0_i32, %c0_i32_0 : i32, i32
  }
  func.func @transform_2(%arg0: i32) -> (i32, i32) {
    %c0_i32 = arith.constant 0 : i32
    %c0_i32_0 = arith.constant 0 : i32
    return %arg0, %c0_i32 : i32, i32
  }
  func.func @transform_3(%arg0: i32) -> (i32, i32) {
    %c0_i32 = arith.constant 0 : i32
    %c0_i32_0 = arith.constant 0 : i32
    return %arg0, %c0_i32 : i32, i32
  }
}

</mosaic_0001>

<llo_original>
// kernel: tpu_custom_call.1
$region0: #{tpu_custom_call.1}
  #allocation0 [shape = 'u32[]', space=smem, size = 0x4, offset = 0x4, fixed_abs, tag = 'smem constant byte address 0x4 - core index']
  #allocation1 [shape = 'u32[72,128]{1,0:T(1,128)}', space=vmem, size = 0x9000, scoped, tag = 'internal scratch']
  %s0 = inlined_call_operand.vmem [shape: f32[1024,32], index: 0, kind: input, shape index: {}]
  %s1 = inlined_call_operand.vmem [shape: f32[1,32], index: 1, kind: input, shape index: {}]
  %s2 = inlined_call_operand.vmem [shape: f32[8,128], index: 2, kind: input, shape index: {}]
  %s3 = inlined_call_operand.hbm [shape: f32[8,128], index: 3, kind: output, shape index: {}]
  %s4 = sld [smem:[#allocation0]]
  $region22: #{tpu_custom_call.1} parent=0
    _
  %s6 = ssub.s32 1, %s4
  %s7 = scalar_select 0, %s6, %s4
  $region1: #{tpu_custom_call.1} parent=0
    #allocation2 [shape = 'u8[4096]{0}', space=vmem, size = 0x1000, scoped, tag = 'output window, operand 0, single buffered']
    #allocation3 [shape = 's32[1]{0}', space=sflag, size = 0x4, scoped, tag = 'scoped memory for tpu_custom_call.1']
    %8 = vsyncpa [#allocation3], 0
    // Predicated region
    $region2: #{tpu_custom_call.1} parent=1 // pred_check
      _
    $region3: #{tpu_custom_call.1} parent=1 // pred_check_branch
      %10 = sbr.rel (0) target = $region5
    $region4: #{tpu_custom_call.1} parent=1 // pred_region
      _
    $region5: #{tpu_custom_call.1} parent=1 // pred_fallthru
      _
    // Predicated region
    $region6: #{tpu_custom_call.1} parent=1 // pred_check
      _
    $region7: #{tpu_custom_call.1} parent=1 // pred_check_branch
      %12 = sbr.rel (0) target = $region9
    $region8: #{tpu_custom_call.1} parent=1 // pred_region
      _
    $region9: #{tpu_custom_call.1} parent=1 // pred_fallthru
      _
    // Predicated region
    $region10: #{tpu_custom_call.1} parent=1 // pred_check
      _
    $region11: #{tpu_custom_call.1} parent=1 // pred_check_branch
      %14 = sbr.rel (0) target = $region13
    $region12: #{tpu_custom_call.1} parent=1 // pred_region
      _
    $region13: #{tpu_custom_call.1} parent=1 // pred_fallthru
      _
    %v15 = vld [vmem:[%s1] sm:$0x1]
    %v16 = vld [vmem:[%s0] sm:$0xff]
    %v17 = vld [vmem:[%s0 + $0x8] sm:$0xff]
    %v18 = vld [vmem:[%s0 + $0x10] sm:$0xff]
    %v19 = vld [vmem:[%s0 + $0x18] sm:$0xff]
    %v20 = vld [vmem:[%s0 + $0x20] sm:$0xff]
    %v21 = vld [vmem:[%s0 + $0x28] sm:$0xff]
    %v22 = vld [vmem:[%s0 + $0x30] sm:$0xff]
    %v23 = vld [vmem:[%s0 + $0x38] sm:$0xff]
    %v24 = vld [vmem:[%s0 + $0x40] sm:$0xff]
    %v25 = vld [vmem:[%s0 + $0x48] sm:$0xff]
    %v26 = vld [vmem:[%s0 + $0x50] sm:$0xff]
    %v27 = vld [vmem:[%s0 + $0x58] sm:$0xff]
    %v28 = vld [vmem:[%s0 + $0x60] sm:$0xff]
    %v29 = vld [vmem:[%s0 + $0x68] sm:$0xff]
    %v30 = vld [vmem:[%s0 + $0x70] sm:$0xff]
    %v31 = vld [vmem:[%s0 + $0x78] sm:$0xff]
    %v32 = vld [vmem:[%s0 + $0x80] sm:$0xff]
    %v33 = vld [vmem:[%s0 + $0x88] sm:$0xff]
    %v34 = vld [vmem:[%s0 + $0x90] sm:$0xff]
    %v35 = vld [vmem:[%s0 + $0x98] sm:$0xff]
    %v36 = vld [vmem:[%s0 + $0xa0] sm:$0xff]
    %v37 = vld [vmem:[%s0 + $0xa8] sm:$0xff]
    %v38 = vld [vmem:[%s0 + $0xb0] sm:$0xff]
    %v39 = vld [vmem:[%s0 + $0xb8] sm:$0xff]
    %v40 = vld [vmem:[%s0 + $0xc0] sm:$0xff]
    %v41 = vld [vmem:[%s0 + $0xc8] sm:$0xff]
    %v42 = vld [vmem:[%s0 + $0xd0] sm:$0xff]
    %v43 = vld [vmem:[%s0 + $0xd8] sm:$0xff]
    %v44 = vld [vmem:[%s0 + $0xe0] sm:$0xff]
    %v45 = vld [vmem:[%s0 + $0xe8] sm:$0xff]
    %v46 = vld [vmem:[%s0 + $0xf0] sm:$0xff]
    %v47 = vld [vmem:[%s0 + $0xf8] sm:$0xff]
    %v48 = vld [vmem:[%s0 + $0x100] sm:$0xff]
    %v49 = vld [vmem:[%s0 + $0x108] sm:$0xff]
    %v50 = vld [vmem:[%s0 + $0x110] sm:$0xff]
    %v51 = vld [vmem:[%s0 + $0x118] sm:$0xff]
    %v52 = vld [vmem:[%s0 + $0x120] sm:$0xff]
    %v53 = vld [vmem:[%s0 + $0x128] sm:$0xff]
    %v54 = vld [vmem:[%s0 + $0x130] sm:$0xff]
    %v55 = vld [vmem:[%s0 + $0x138] sm:$0xff]
    %v56 = vld [vmem:[%s0 + $0x140] sm:$0xff]
    %v57 = vld [vmem:[%s0 + $0x148] sm:$0xff]
    %v58 = vld [vmem:[%s0 + $0x150] sm:$0xff]
    %v59 = vld [vmem:[%s0 + $0x158] sm:$0xff]
    %v60 = vld [vmem:[%s0 + $0x160] sm:$0xff]
    %v61 = vld [vmem:[%s0 + $0x168] sm:$0xff]
    %v62 = vld [vmem:[%s0 + $0x170] sm:$0xff]
    %v63 = vld [vmem:[%s0 + $0x178] sm:$0xff]
    %v64 = vld [vmem:[%s0 + $0x180] sm:$0xff]
    %v65 = vld [vmem:[%s0 + $0x188] sm:$0xff]
    %v66 = vld [vmem:[%s0 + $0x190] sm:$0xff]
    %v67 = vld [vmem:[%s0 + $0x198] sm:$0xff]
    %v68 = vld [vmem:[%s0 + $0x1a0] sm:$0xff]
    %v69 = vld [vmem:[%s0 + $0x1a8] sm:$0xff]
    %v70 = vld [vmem:[%s0 + $0x1b0] sm:$0xff]
    %v71 = vld [vmem:[%s0 + $0x1b8] sm:$0xff]
    %v72 = vld [vmem:[%s0 + $0x1c0] sm:$0xff]
    %v73 = vld [vmem:[%s0 + $0x1c8] sm:$0xff]
    %v74 = vld [vmem:[%s0 + $0x1d0] sm:$0xff]
    %v75 = vld [vmem:[%s0 + $0x1d8] sm:$0xff]
    %v76 = vld [vmem:[%s0 + $0x1e0] sm:$0xff]
    %v77 = vld [vmem:[%s0 + $0x1e8] sm:$0xff]
    %v78 = vld [vmem:[%s0 + $0x1f0] sm:$0xff]
    %v79 = vld [vmem:[%s0 + $0x1f8] sm:$0xff]
    %v80 = vld [vmem:[%s0 + $0x200] sm:$0xff]
    %v81 = vld [vmem:[%s0 + $0x208] sm:$0xff]
    %v82 = vld [vmem:[%s0 + $0x210] sm:$0xff]
    %v83 = vld [vmem:[%s0 + $0x218] sm:$0xff]
    %v84 = vld [vmem:[%s0 + $0x220] sm:$0xff]
    %v85 = vld [vmem:[%s0 + $0x228] sm:$0xff]
    %v86 = vld [vmem:[%s0 + $0x230] sm:$0xff]
    %v87 = vld [vmem:[%s0 + $0x238] sm:$0xff]
    %v88 = vld [vmem:[%s0 + $0x240] sm:$0xff]
    %v89 = vld [vmem:[%s0 + $0x248] sm:$0xff]
    %v90 = vld [vmem:[%s0 + $0x250] sm:$0xff]
    %v91 = vld [vmem:[%s0 + $0x258] sm:$0xff]
    %v92 = vld [vmem:[%s0 + $0x260] sm:$0xff]
    %v93 = vld [vmem:[%s0 + $0x268] sm:$0xff]
    %v94 = vld [vmem:[%s0 + $0x270] sm:$0xff]
    %v95 = vld [vmem:[%s0 + $0x278] sm:$0xff]
    %v96 = vld [vmem:[%s0 + $0x280] sm:$0xff]
    %v97 = vld [vmem:[%s0 + $0x288] sm:$0xff]
    %v98 = vld [vmem:[%s0 + $0x290] sm:$0xff]
    %v99 = vld [vmem:[%s0 + $0x298] sm:$0xff]
    %v100 = vld [vmem:[%s0 + $0x2a0] sm:$0xff]
    %v101 = vld [vmem:[%s0 + $0x2a8] sm:$0xff]
    %v102 = vld [vmem:[%s0 + $0x2b0] sm:$0xff]
    %v103 = vld [vmem:[%s0 + $0x2b8] sm:$0xff]
    %v104 = vld [vmem:[%s0 + $0x2c0] sm:$0xff]
    %v105 = vld [vmem:[%s0 + $0x2c8] sm:$0xff]
    %v106 = vld [vmem:[%s0 + $0x2d0] sm:$0xff]
    %v107 = vld [vmem:[%s0 + $0x2d8] sm:$0xff]
    %v108 = vld [vmem:[%s0 + $0x2e0] sm:$0xff]
    %v109 = vld [vmem:[%s0 + $0x2e8] sm:$0xff]
    %v110 = vld [vmem:[%s0 + $0x2f0] sm:$0xff]
    %v111 = vld [vmem:[%s0 + $0x2f8] sm:$0xff]
    %v112 = vld [vmem:[%s0 + $0x300] sm:$0xff]
    %v113 = vld [vmem:[%s0 + $0x308] sm:$0xff]
    %v114 = vld [vmem:[%s0 + $0x310] sm:$0xff]
    %v115 = vld [vmem:[%s0 + $0x318] sm:$0xff]
    %v116 = vld [vmem:[%s0 + $0x320] sm:$0xff]
    %v117 = vld [vmem:[%s0 + $0x328] sm:$0xff]
    %v118 = vld [vmem:[%s0 + $0x330] sm:$0xff]
    %v119 = vld [vmem:[%s0 + $0x338] sm:$0xff]
    %v120 = vld [vmem:[%s0 + $0x340] sm:$0xff]
    %v121 = vld [vmem:[%s0 + $0x348] sm:$0xff]
    %v122 = vld [vmem:[%s0 + $0x350] sm:$0xff]
    %v123 = vld [vmem:[%s0 + $0x358] sm:$0xff]
    %v124 = vld [vmem:[%s0 + $0x360] sm:$0xff]
    %v125 = vld [vmem:[%s0 + $0x368] sm:$0xff]
    %v126 = vld [vmem:[%s0 + $0x370] sm:$0xff]
    %v127 = vld [vmem:[%s0 + $0x378] sm:$0xff]
    %v128 = vld [vmem:[%s0 + $0x380] sm:$0xff]
    %v129 = vld [vmem:[%s0 + $0x388] sm:$0xff]
    %v130 = vld [vmem:[%s0 + $0x390] sm:$0xff]
    %v131 = vld [vmem:[%s0 + $0x398] sm:$0xff]
    %v132 = vld [vmem:[%s0 + $0x3a0] sm:$0xff]
    %v133 = vld [vmem:[%s0 + $0x3a8] sm:$0xff]
    %v134 = vld [vmem:[%s0 + $0x3b0] sm:$0xff]
    %v135 = vld [vmem:[%s0 + $0x3b8] sm:$0xff]
    %v136 = vld [vmem:[%s0 + $0x3c0] sm:$0xff]
    %v137 = vld [vmem:[%s0 + $0x3c8] sm:$0xff]
    %v138 = vld [vmem:[%s0 + $0x3d0] sm:$0xff]
    %v139 = vld [vmem:[%s0 + $0x3d8] sm:$0xff]
    %v140 = vld [vmem:[%s0 + $0x3e0] sm:$0xff]
    %v141 = vld [vmem:[%s0 + $0x3e8] sm:$0xff]
    %v142 = vld [vmem:[%s0 + $0x3f0] sm:$0xff]
    %v143 = vld [vmem:[%s0 + $0x3f8] sm:$0xff]
    %v145 = vperm.slane %v15, 0
    %v147 = vmul.f32 %v16, %v145
    %v148 = vmul.f32 %v17, %v145
    %v149 = vmul.f32 %v18, %v145
    %v150 = vmul.f32 %v19, %v145
    %v151 = vmul.f32 %v20, %v145
    %v152 = vmul.f32 %v21, %v145
    %v153 = vmul.f32 %v22, %v145
    %v154 = vmul.f32 %v23, %v145
    %v155 = vmul.f32 %v24, %v145
    %v156 = vmul.f32 %v25, %v145
    %v157 = vmul.f32 %v26, %v145
    %v158 = vmul.f32 %v27, %v145
    %v159 = vmul.f32 %v28, %v145
    %v160 = vmul.f32 %v29, %v145
    %v161 = vmul.f32 %v30, %v145
    %v162 = vmul.f32 %v31, %v145
    %v163 = vmul.f32 %v32, %v145
    %v164 = vmul.f32 %v33, %v145
    %v165 = vmul.f32 %v34, %v145
    %v166 = vmul.f32 %v35, %v145
    %v167 = vmul.f32 %v36, %v145
    %v168 = vmul.f32 %v37, %v145
    %v169 = vmul.f32 %v38, %v145
    %v170 = vmul.f32 %v39, %v145
    %v171 = vmul.f32 %v40, %v145
    %v172 = vmul.f32 %v41, %v145
    %v173 = vmul.f32 %v42, %v145
    %v174 = vmul.f32 %v43, %v145
    %v175 = vmul.f32 %v44, %v145
    %v176 = vmul.f32 %v45, %v145
    %v177 = vmul.f32 %v46, %v145
    %v178 = vmul.f32 %v47, %v145
    %v179 = vmul.f32 %v48, %v145
    %v180 = vmul.f32 %v49, %v145
    %v181 = vmul.f32 %v50, %v145
    %v182 = vmul.f32 %v51, %v145
    %v183 = vmul.f32 %v52, %v145
    %v184 = vmul.f32 %v53, %v145
    %v185 = vmul.f32 %v54, %v145
    %v186 = vmul.f32 %v55, %v145
    %v187 = vmul.f32 %v56, %v145
    %v188 = vmul.f32 %v57, %v145
    %v189 = vmul.f32 %v58, %v145
    %v190 = vmul.f32 %v59, %v145
    %v191 = vmul.f32 %v60, %v145
    %v192 = vmul.f32 %v61, %v145
    %v193 = vmul.f32 %v62, %v145
    %v194 = vmul.f32 %v63, %v145
    %v195 = vmul.f32 %v64, %v145
    %v196 = vmul.f32 %v65, %v145
    %v197 = vmul.f32 %v66, %v145
    %v198 = vmul.f32 %v67, %v145
    %v199 = vmul.f32 %v68, %v145
    %v200 = vmul.f32 %v69, %v145
    %v201 = vmul.f32 %v70, %v145
    %v202 = vmul.f32 %v71, %v145
    %v203 = vmul.f32 %v72, %v145
    %v204 = vmul.f32 %v73, %v145
    %v205 = vmul.f32 %v74, %v145
    %v206 = vmul.f32 %v75, %v145
    %v207 = vmul.f32 %v76, %v145
    %v208 = vmul.f32 %v77, %v145
    %v209 = vmul.f32 %v78, %v145
    %v210 = vmul.f32 %v79, %v145
    %v211 = vmul.f32 %v80, %v145
    %v212 = vmul.f32 %v81, %v145
    %v213 = vmul.f32 %v82, %v145
    %v214 = vmul.f32 %v83, %v145
    %v215 = vmul.f32 %v84, %v145
    %v216 = vmul.f32 %v85, %v145
    %v217 = vmul.f32 %v86, %v145
    %v218 = vmul.f32 %v87, %v145
    %v219 = vmul.f32 %v88, %v145
    %v220 = vmul.f32 %v89, %v145
    %v221 = vmul.f32 %v90, %v145
    %v222 = vmul.f32 %v91, %v145
    %v223 = vmul.f32 %v92, %v145
    %v224 = vmul.f32 %v93, %v145
    %v225 = vmul.f32 %v94, %v145
    %v226 = vmul.f32 %v95, %v145
    %v227 = vmul.f32 %v96, %v145
    %v228 = vmul.f32 %v97, %v145
    %v229 = vmul.f32 %v98, %v145
    %v230 = vmul.f32 %v99, %v145
    %v231 = vmul.f32 %v100, %v145
    %v232 = vmul.f32 %v101, %v145
    %v233 = vmul.f32 %v102, %v145
    %v234 = vmul.f32 %v103, %v145
    %v235 = vmul.f32 %v104, %v145
    %v236 = vmul.f32 %v105, %v145
    %v237 = vmul.f32 %v106, %v145
    %v238 = vmul.f32 %v107, %v145
    %v239 = vmul.f32 %v108, %v145
    %v240 = vmul.f32 %v109, %v145
    %v241 = vmul.f32 %v110, %v145
    %v242 = vmul.f32 %v111, %v145
    %v243 = vmul.f32 %v112, %v145
    %v244 = vmul.f32 %v113, %v145
    %v245 = vmul.f32 %v114, %v145
    %v246 = vmul.f32 %v115, %v145
    %v247 = vmul.f32 %v116, %v145
    %v248 = vmul.f32 %v117, %v145
    %v249 = vmul.f32 %v118, %v145
    %v250 = vmul.f32 %v119, %v145
    %v251 = vmul.f32 %v120, %v145
    %v252 = vmul.f32 %v121, %v145
    %v253 = vmul.f32 %v122, %v145
    %v254 = vmul.f32 %v123, %v145
    %v255 = vmul.f32 %v124, %v145
    %v256 = vmul.f32 %v125, %v145
    %v257 = vmul.f32 %v126, %v145
    %v258 = vmul.f32 %v127, %v145
    %v259 = vmul.f32 %v128, %v145
    %v260 = vmul.f32 %v129, %v145
    %v261 = vmul.f32 %v130, %v145
    %v262 = vmul.f32 %v131, %v145
    %v263 = vmul.f32 %v132, %v145
    %v264 = vmul.f32 %v133, %v145
    %v265 = vmul.f32 %v134, %v145
    %v266 = vmul.f32 %v135, %v145
    %v267 = vmul.f32 %v136, %v145
    %v268 = vmul.f32 %v137, %v145
    %v269 = vmul.f32 %v138, %v145
    %v270 = vmul.f32 %v139, %v145
    %v271 = vmul.f32 %v140, %v145
    %v272 = vmul.f32 %v141, %v145
    %v273 = vmul.f32 %v142, %v145
    %v274 = vmul.f32 %v143, %v145
    %vm275 = vcmask 261120
    %v276 = vsel %vm275, %v147, 0.0
    %277 = vadd.xlane.f32.xlu0 %v276
    %v278 = vpop.xlane.xlu0 %277
    %v279 = vsel %vm275, %v148, 0.0
    %280 = vadd.xlane.f32.xlu0 %v279
    %v281 = vpop.xlane.xlu0 %280
    %v282 = vsel %vm275, %v149, 0.0
    %283 = vadd.xlane.f32.xlu0 %v282
    %v284 = vpop.xlane.xlu0 %283
    %v285 = vsel %vm275, %v150, 0.0
    %286 = vadd.xlane.f32.xlu0 %v285
    %v287 = vpop.xlane.xlu0 %286
    %v288 = vsel %vm275, %v151, 0.0
    %289 = vadd.xlane.f32.xlu0 %v288
    %v290 = vpop.xlane.xlu0 %289
    %v291 = vsel %vm275, %v152, 0.0
    %292 = vadd.xlane.f32.xlu0 %v291
    %v293 = vpop.xlane.xlu0 %292
    %v294 = vsel %vm275, %v153, 0.0
    %295 = vadd.xlane.f32.xlu0 %v294
    %v296 = vpop.xlane.xlu0 %295
    %v297 = vsel %vm275, %v154, 0.0
    %298 = vadd.xlane.f32.xlu0 %v297
    %v299 = vpop.xlane.xlu0 %298
    %v300 = vsel %vm275, %v155, 0.0
    %301 = vadd.xlane.f32.xlu0 %v300
    %v302 = vpop.xlane.xlu0 %301
    %v303 = vsel %vm275, %v156, 0.0
    %304 = vadd.xlane.f32.xlu0 %v303
    %v305 = vpop.xlane.xlu0 %304
    %v306 = vsel %vm275, %v157, 0.0
    %307 = vadd.xlane.f32.xlu0 %v306
    %v308 = vpop.xlane.xlu0 %307
    %v309 = vsel %vm275, %v158, 0.0
    %310 = vadd.xlane.f32.xlu0 %v309
    %v311 = vpop.xlane.xlu0 %310
    %v312 = vsel %vm275, %v159, 0.0
    %313 = vadd.xlane.f32.xlu0 %v312
    %v314 = vpop.xlane.xlu0 %313
    %v315 = vsel %vm275, %v160, 0.0
    %316 = vadd.xlane.f32.xlu0 %v315
    %v317 = vpop.xlane.xlu0 %316
    %v318 = vsel %vm275, %v161, 0.0
    %319 = vadd.xlane.f32.xlu0 %v318
    %v320 = vpop.xlane.xlu0 %319
    %v321 = vsel %vm275, %v162, 0.0
    %322 = vadd.xlane.f32.xlu0 %v321
    %v323 = vpop.xlane.xlu0 %322
    %v324 = vsel %vm275, %v163, 0.0
    %325 = vadd.xlane.f32.xlu0 %v324
    %v326 = vpop.xlane.xlu0 %325
    %v327 = vsel %vm275, %v164, 0.0
    %328 = vadd.xlane.f32.xlu0 %v327
    %v329 = vpop.xlane.xlu0 %328
    %v330 = vsel %vm275, %v165, 0.0
    %331 = vadd.xlane.f32.xlu0 %v330
    %v332 = vpop.xlane.xlu0 %331
    %v333 = vsel %vm275, %v166, 0.0
    %334 = vadd.xlane.f32.xlu0 %v333
    %v335 = vpop.xlane.xlu0 %334
    %v336 = vsel %vm275, %v167, 0.0
    %337 = vadd.xlane.f32.xlu0 %v336
    %v338 = vpop.xlane.xlu0 %337
    %v339 = vsel %vm275, %v168, 0.0
    %340 = vadd.xlane.f32.xlu0 %v339
    %v341 = vpop.xlane.xlu0 %340
    %v342 = vsel %vm275, %v169, 0.0
    %343 = vadd.xlane.f32.xlu0 %v342
    %v344 = vpop.xlane.xlu0 %343
    %v345 = vsel %vm275, %v170, 0.0
    %346 = vadd.xlane.f32.xlu0 %v345
    %v347 = vpop.xlane.xlu0 %346
    %v348 = vsel %vm275, %v171, 0.0
    %349 = vadd.xlane.f32.xlu0 %v348
    %v350 = vpop.xlane.xlu0 %349
    %v351 = vsel %vm275, %v172, 0.0
    %352 = vadd.xlane.f32.xlu0 %v351
    %v353 = vpop.xlane.xlu0 %352
    %v354 = vsel %vm275, %v173, 0.0
    %355 = vadd.xlane.f32.xlu0 %v354
    %v356 = vpop.xlane.xlu0 %355
    %v357 = vsel %vm275, %v174, 0.0
    %358 = vadd.xlane.f32.xlu0 %v357
    %v359 = vpop.xlane.xlu0 %358
    %v360 = vsel %vm275, %v175, 0.0
    %361 = vadd.xlane.f32.xlu0 %v360
    %v362 = vpop.xlane.xlu0 %361
    %v363 = vsel %vm275, %v176, 0.0
    %364 = vadd.xlane.f32.xlu0 %v363
    %v365 = vpop.xlane.xlu0 %364
    %v366 = vsel %vm275, %v177, 0.0
    %367 = vadd.xlane.f32.xlu0 %v366
    %v368 = vpop.xlane.xlu0 %367
    %v369 = vsel %vm275, %v178, 0.0
    %370 = vadd.xlane.f32.xlu0 %v369
    %v371 = vpop.xlane.xlu0 %370
    %v372 = vsel %vm275, %v179, 0.0
    %373 = vadd.xlane.f32.xlu0 %v372
    %v374 = vpop.xlane.xlu0 %373
    %v375 = vsel %vm275, %v180, 0.0
    %376 = vadd.xlane.f32.xlu0 %v375
    %v377 = vpop.xlane.xlu0 %376
    %v378 = vsel %vm275, %v181, 0.0
    %379 = vadd.xlane.f32.xlu0 %v378
    %v380 = vpop.xlane.xlu0 %379
    %v381 = vsel %vm275, %v182, 0.0
    %382 = vadd.xlane.f32.xlu0 %v381
    %v383 = vpop.xlane.xlu0 %382
    %v384 = vsel %vm275, %v183, 0.0
    %385 = vadd.xlane.f32.xlu0 %v384
    %v386 = vpop.xlane.xlu0 %385
    %v387 = vsel %vm275, %v184, 0.0
    %388 = vadd.xlane.f32.xlu0 %v387
    %v389 = vpop.xlane.xlu0 %388
    %v390 = vsel %vm275, %v185, 0.0
    %391 = vadd.xlane.f32.xlu0 %v390
    %v392 = vpop.xlane.xlu0 %391
    %v393 = vsel %vm275, %v186, 0.0
    %394 = vadd.xlane.f32.xlu0 %v393
    %v395 = vpop.xlane.xlu0 %394
    %v396 = vsel %vm275, %v187, 0.0
    %397 = vadd.xlane.f32.xlu0 %v396
    %v398 = vpop.xlane.xlu0 %397
    %v399 = vsel %vm275, %v188, 0.0
    %400 = vadd.xlane.f32.xlu0 %v399
    %v401 = vpop.xlane.xlu0 %400
    %v402 = vsel %vm275, %v189, 0.0
    %403 = vadd.xlane.f32.xlu0 %v402
    %v404 = vpop.xlane.xlu0 %403
    %v405 = vsel %vm275, %v190, 0.0
    %406 = vadd.xlane.f32.xlu0 %v405
    %v407 = vpop.xlane.xlu0 %406
    %v408 = vsel %vm275, %v191, 0.0
    %409 = vadd.xlane.f32.xlu0 %v408
    %v410 = vpop.xlane.xlu0 %409
    %v411 = vsel %vm275, %v192, 0.0
    %412 = vadd.xlane.f32.xlu0 %v411
    %v413 = vpop.xlane.xlu0 %412
    %v414 = vsel %vm275, %v193, 0.0
    %415 = vadd.xlane.f32.xlu0 %v414
    %v416 = vpop.xlane.xlu0 %415
    %v417 = vsel %vm275, %v194, 0.0
    %418 = vadd.xlane.f32.xlu0 %v417
    %v419 = vpop.xlane.xlu0 %418
    %v420 = vsel %vm275, %v195, 0.0
    %421 = vadd.xlane.f32.xlu0 %v420
    %v422 = vpop.xlane.xlu0 %421
    %v423 = vsel %vm275, %v196, 0.0
    %424 = vadd.xlane.f32.xlu0 %v423
    %v425 = vpop.xlane.xlu0 %424
    %v426 = vsel %vm275, %v197, 0.0
    %427 = vadd.xlane.f32.xlu0 %v426
    %v428 = vpop.xlane.xlu0 %427
    %v429 = vsel %vm275, %v198, 0.0
    %430 = vadd.xlane.f32.xlu0 %v429
    %v431 = vpop.xlane.xlu0 %430
    %v432 = vsel %vm275, %v199, 0.0
    %433 = vadd.xlane.f32.xlu0 %v432
    %v434 = vpop.xlane.xlu0 %433
    %v435 = vsel %vm275, %v200, 0.0
    %436 = vadd.xlane.f32.xlu0 %v435
    %v437 = vpop.xlane.xlu0 %436
    %v438 = vsel %vm275, %v201, 0.0
    %439 = vadd.xlane.f32.xlu0 %v438
    %v440 = vpop.xlane.xlu0 %439
    %v441 = vsel %vm275, %v202, 0.0
    %442 = vadd.xlane.f32.xlu0 %v441
    %v443 = vpop.xlane.xlu0 %442
    %v444 = vsel %vm275, %v203, 0.0
    %445 = vadd.xlane.f32.xlu0 %v444
    %v446 = vpop.xlane.xlu0 %445
    %v447 = vsel %vm275, %v204, 0.0
    %448 = vadd.xlane.f32.xlu0 %v447
    %v449 = vpop.xlane.xlu0 %448
    %v450 = vsel %vm275, %v205, 0.0
    %451 = vadd.xlane.f32.xlu0 %v450
    %v452 = vpop.xlane.xlu0 %451
    %v453 = vsel %vm275, %v206, 0.0
    %454 = vadd.xlane.f32.xlu0 %v453
    %v455 = vpop.xlane.xlu0 %454
    %v456 = vsel %vm275, %v207, 0.0
    %457 = vadd.xlane.f32.xlu0 %v456
    %v458 = vpop.xlane.xlu0 %457
    %v459 = vsel %vm275, %v208, 0.0
    %460 = vadd.xlane.f32.xlu0 %v459
    %v461 = vpop.xlane.xlu0 %460
    %v462 = vsel %vm275, %v209, 0.0
    %463 = vadd.xlane.f32.xlu0 %v462
    %v464 = vpop.xlane.xlu0 %463
    %v465 = vsel %vm275, %v210, 0.0
    %466 = vadd.xlane.f32.xlu0 %v465
    %v467 = vpop.xlane.xlu0 %466
    %v468 = vsel %vm275, %v211, 0.0
    %469 = vadd.xlane.f32.xlu0 %v468
    %v470 = vpop.xlane.xlu0 %469
    %v471 = vsel %vm275, %v212, 0.0
    %472 = vadd.xlane.f32.xlu0 %v471
    %v473 = vpop.xlane.xlu0 %472
    %v474 = vsel %vm275, %v213, 0.0
    %475 = vadd.xlane.f32.xlu0 %v474
    %v476 = vpop.xlane.xlu0 %475
    %v477 = vsel %vm275, %v214, 0.0
    %478 = vadd.xlane.f32.xlu0 %v477
    %v479 = vpop.xlane.xlu0 %478
    %v480 = vsel %vm275, %v215, 0.0
    %481 = vadd.xlane.f32.xlu0 %v480
    %v482 = vpop.xlane.xlu0 %481
    %v483 = vsel %vm275, %v216, 0.0
    %484 = vadd.xlane.f32.xlu0 %v483
    %v485 = vpop.xlane.xlu0 %484
    %v486 = vsel %vm275, %v217, 0.0
    %487 = vadd.xlane.f32.xlu0 %v486
    %v488 = vpop.xlane.xlu0 %487
    %v489 = vsel %vm275, %v218, 0.0
    %490 = vadd.xlane.f32.xlu0 %v489
    %v491 = vpop.xlane.xlu0 %490
    %v492 = vsel %vm275, %v219, 0.0
    %493 = vadd.xlane.f32.xlu0 %v492
    %v494 = vpop.xlane.xlu0 %493
    %v495 = vsel %vm275, %v220, 0.0
    %496 = vadd.xlane.f32.xlu0 %v495
    %v497 = vpop.xlane.xlu0 %496
    %v498 = vsel %vm275, %v221, 0.0
    %499 = vadd.xlane.f32.xlu0 %v498
    %v500 = vpop.xlane.xlu0 %499
    %v501 = vsel %vm275, %v222, 0.0
    %502 = vadd.xlane.f32.xlu0 %v501
    %v503 = vpop.xlane.xlu0 %502
    %v504 = vsel %vm275, %v223, 0.0
    %505 = vadd.xlane.f32.xlu0 %v504
    %v506 = vpop.xlane.xlu0 %505
    %v507 = vsel %vm275, %v224, 0.0
    %508 = vadd.xlane.f32.xlu0 %v507
    %v509 = vpop.xlane.xlu0 %508
    %v510 = vsel %vm275, %v225, 0.0
    %511 = vadd.xlane.f32.xlu0 %v510
    %v512 = vpop.xlane.xlu0 %511
    %v513 = vsel %vm275, %v226, 0.0
    %514 = vadd.xlane.f32.xlu0 %v513
    %v515 = vpop.xlane.xlu0 %514
    %v516 = vsel %vm275, %v227, 0.0
    %517 = vadd.xlane.f32.xlu0 %v516
    %v518 = vpop.xlane.xlu0 %517
    %v519 = vsel %vm275, %v228, 0.0
    %520 = vadd.xlane.f32.xlu0 %v519
    %v521 = vpop.xlane.xlu0 %520
    %v522 = vsel %vm275, %v229, 0.0
    %523 = vadd.xlane.f32.xlu0 %v522
    %v524 = vpop.xlane.xlu0 %523
    %v525 = vsel %vm275, %v230, 0.0
    %526 = vadd.xlane.f32.xlu0 %v525
    %v527 = vpop.xlane.xlu0 %526
    %v528 = vsel %vm275, %v231, 0.0
    %529 = vadd.xlane.f32.xlu0 %v528
    %v530 = vpop.xlane.xlu0 %529
    %v531 = vsel %vm275, %v232, 0.0
    %532 = vadd.xlane.f32.xlu0 %v531
    %v533 = vpop.xlane.xlu0 %532
    %v534 = vsel %vm275, %v233, 0.0
    %535 = vadd.xlane.f32.xlu0 %v534
    %v536 = vpop.xlane.xlu0 %535
    %v537 = vsel %vm275, %v234, 0.0
    %538 = vadd.xlane.f32.xlu0 %v537
    %v539 = vpop.xlane.xlu0 %538
    %v540 = vsel %vm275, %v235, 0.0
    %541 = vadd.xlane.f32.xlu0 %v540
    %v542 = vpop.xlane.xlu0 %541
    %v543 = vsel %vm275, %v236, 0.0
    %544 = vadd.xlane.f32.xlu0 %v543
    %v545 = vpop.xlane.xlu0 %544
    %v546 = vsel %vm275, %v237, 0.0
    %547 = vadd.xlane.f32.xlu0 %v546
    %v548 = vpop.xlane.xlu0 %547
    %v549 = vsel %vm275, %v238, 0.0
    %550 = vadd.xlane.f32.xlu0 %v549
    %v551 = vpop.xlane.xlu0 %550
    %v552 = vsel %vm275, %v239, 0.0
    %553 = vadd.xlane.f32.xlu0 %v552
    %v554 = vpop.xlane.xlu0 %553
    %v555 = vsel %vm275, %v240, 0.0
    %556 = vadd.xlane.f32.xlu0 %v555
    %v557 = vpop.xlane.xlu0 %556
    %v558 = vsel %vm275, %v241, 0.0
    %559 = vadd.xlane.f32.xlu0 %v558
    %v560 = vpop.xlane.xlu0 %559
    %v561 = vsel %vm275, %v242, 0.0
    %562 = vadd.xlane.f32.xlu0 %v561
    %v563 = vpop.xlane.xlu0 %562
    %v564 = vsel %vm275, %v243, 0.0
    %565 = vadd.xlane.f32.xlu0 %v564
    %v566 = vpop.xlane.xlu0 %565
    %v567 = vsel %vm275, %v244, 0.0
    %568 = vadd.xlane.f32.xlu0 %v567
    %v569 = vpop.xlane.xlu0 %568
    %v570 = vsel %vm275, %v245, 0.0
    %571 = vadd.xlane.f32.xlu0 %v570
    %v572 = vpop.xlane.xlu0 %571
    %v573 = vsel %vm275, %v246, 0.0
    %574 = vadd.xlane.f32.xlu0 %v573
    %v575 = vpop.xlane.xlu0 %574
    %v576 = vsel %vm275, %v247, 0.0
    %577 = vadd.xlane.f32.xlu0 %v576
    %v578 = vpop.xlane.xlu0 %577
    %v579 = vsel %vm275, %v248, 0.0
    %580 = vadd.xlane.f32.xlu0 %v579
    %v581 = vpop.xlane.xlu0 %580
    %v582 = vsel %vm275, %v249, 0.0
    %583 = vadd.xlane.f32.xlu0 %v582
    %v584 = vpop.xlane.xlu0 %583
    %v585 = vsel %vm275, %v250, 0.0
    %586 = vadd.xlane.f32.xlu0 %v585
    %v587 = vpop.xlane.xlu0 %586
    %v588 = vsel %vm275, %v251, 0.0
    %589 = vadd.xlane.f32.xlu0 %v588
    %v590 = vpop.xlane.xlu0 %589
    %v591 = vsel %vm275, %v252, 0.0
    %592 = vadd.xlane.f32.xlu0 %v591
    %v593 = vpop.xlane.xlu0 %592
    %v594 = vsel %vm275, %v253, 0.0
    %595 = vadd.xlane.f32.xlu0 %v594
    %v596 = vpop.xlane.xlu0 %595
    %v597 = vsel %vm275, %v254, 0.0
    %598 = vadd.xlane.f32.xlu0 %v597
    %v599 = vpop.xlane.xlu0 %598
    %v600 = vsel %vm275, %v255, 0.0
    %601 = vadd.xlane.f32.xlu0 %v600
    %v602 = vpop.xlane.xlu0 %601
    %v603 = vsel %vm275, %v256, 0.0
    %604 = vadd.xlane.f32.xlu0 %v603
    %v605 = vpop.xlane.xlu0 %604
    %v606 = vsel %vm275, %v257, 0.0
    %607 = vadd.xlane.f32.xlu0 %v606
    %v608 = vpop.xlane.xlu0 %607
    %v609 = vsel %vm275, %v258, 0.0
    %610 = vadd.xlane.f32.xlu0 %v609
    %v611 = vpop.xlane.xlu0 %610
    %v612 = vsel %vm275, %v259, 0.0
    %613 = vadd.xlane.f32.xlu0 %v612
    %v614 = vpop.xlane.xlu0 %613
    %v615 = vsel %vm275, %v260, 0.0
    %616 = vadd.xlane.f32.xlu0 %v615
    %v617 = vpop.xlane.xlu0 %616
    %v618 = vsel %vm275, %v261, 0.0
    %619 = vadd.xlane.f32.xlu0 %v618
    %v620 = vpop.xlane.xlu0 %619
    %v621 = vsel %vm275, %v262, 0.0
    %622 = vadd.xlane.f32.xlu0 %v621
    %v623 = vpop.xlane.xlu0 %622
    %v624 = vsel %vm275, %v263, 0.0
    %625 = vadd.xlane.f32.xlu0 %v624
    %v626 = vpop.xlane.xlu0 %625
    %v627 = vsel %vm275, %v264, 0.0
    %628 = vadd.xlane.f32.xlu0 %v627
    %v629 = vpop.xlane.xlu0 %628
    %v630 = vsel %vm275, %v265, 0.0
    %631 = vadd.xlane.f32.xlu0 %v630
    %v632 = vpop.xlane.xlu0 %631
    %v633 = vsel %vm275, %v266, 0.0
    %634 = vadd.xlane.f32.xlu0 %v633
    %v635 = vpop.xlane.xlu0 %634
    %v636 = vsel %vm275, %v267, 0.0
    %637 = vadd.xlane.f32.xlu0 %v636
    %v638 = vpop.xlane.xlu0 %637
    %v639 = vsel %vm275, %v268, 0.0
    %640 = vadd.xlane.f32.xlu0 %v639
    %v641 = vpop.xlane.xlu0 %640
    %v642 = vsel %vm275, %v269, 0.0
    %643 = vadd.xlane.f32.xlu0 %v642
    %v644 = vpop.xlane.xlu0 %643
    %v645 = vsel %vm275, %v270, 0.0
    %646 = vadd.xlane.f32.xlu0 %v645
    %v647 = vpop.xlane.xlu0 %646
    %v648 = vsel %vm275, %v271, 0.0
    %649 = vadd.xlane.f32.xlu0 %v648
    %v650 = vpop.xlane.xlu0 %649
    %v651 = vsel %vm275, %v272, 0.0
    %652 = vadd.xlane.f32.xlu0 %v651
    %v653 = vpop.xlane.xlu0 %652
    %v654 = vsel %vm275, %v273, 0.0
    %655 = vadd.xlane.f32.xlu0 %v654
    %v656 = vpop.xlane.xlu0 %655
    %v657 = vsel %vm275, %v274, 0.0
    %658 = vadd.xlane.f32.xlu0 %v657
    %v659 = vpop.xlane.xlu0 %658
    %v660 = vmax.f32 %v278, 0.0
    %v661 = vmax.f32 %v281, 0.0
    %v662 = vmax.f32 %v284, 0.0
    %v663 = vmax.f32 %v287, 0.0
    %v664 = vmax.f32 %v290, 0.0
    %v665 = vmax.f32 %v293, 0.0
    %v666 = vmax.f32 %v296, 0.0
    %v667 = vmax.f32 %v299, 0.0
    %v668 = vmax.f32 %v302, 0.0
    %v669 = vmax.f32 %v305, 0.0
    %v670 = vmax.f32 %v308, 0.0
    %v671 = vmax.f32 %v311, 0.0
    %v672 = vmax.f32 %v314, 0.0
    %v673 = vmax.f32 %v317, 0.0
    %v674 = vmax.f32 %v320, 0.0
    %v675 = vmax.f32 %v323, 0.0
    %v676 = vmax.f32 %v326, 0.0
    %v677 = vmax.f32 %v329, 0.0
    %v678 = vmax.f32 %v332, 0.0
    %v679 = vmax.f32 %v335, 0.0
    %v680 = vmax.f32 %v338, 0.0
    %v681 = vmax.f32 %v341, 0.0
    %v682 = vmax.f32 %v344, 0.0
    %v683 = vmax.f32 %v347, 0.0
    %v684 = vmax.f32 %v350, 0.0
    %v685 = vmax.f32 %v353, 0.0
    %v686 = vmax.f32 %v356, 0.0
    %v687 = vmax.f32 %v359, 0.0
    %v688 = vmax.f32 %v362, 0.0
    %v689 = vmax.f32 %v365, 0.0
    %v690 = vmax.f32 %v368, 0.0
    %v691 = vmax.f32 %v371, 0.0
    %v692 = vmax.f32 %v374, 0.0
    %v693 = vmax.f32 %v377, 0.0
    %v694 = vmax.f32 %v380, 0.0
    %v695 = vmax.f32 %v383, 0.0
    %v696 = vmax.f32 %v386, 0.0
    %v697 = vmax.f32 %v389, 0.0
    %v698 = vmax.f32 %v392, 0.0
    %v699 = vmax.f32 %v395, 0.0
    %v700 = vmax.f32 %v398, 0.0
    %v701 = vmax.f32 %v401, 0.0
    %v702 = vmax.f32 %v404, 0.0
    %v703 = vmax.f32 %v407, 0.0
    %v704 = vmax.f32 %v410, 0.0
    %v705 = vmax.f32 %v413, 0.0
    %v706 = vmax.f32 %v416, 0.0
    %v707 = vmax.f32 %v419, 0.0
    %v708 = vmax.f32 %v422, 0.0
    %v709 = vmax.f32 %v425, 0.0
    %v710 = vmax.f32 %v428, 0.0
    %v711 = vmax.f32 %v431, 0.0
    %v712 = vmax.f32 %v434, 0.0
    %v713 = vmax.f32 %v437, 0.0
    %v714 = vmax.f32 %v440, 0.0
    %v715 = vmax.f32 %v443, 0.0
    %v716 = vmax.f32 %v446, 0.0
    %v717 = vmax.f32 %v449, 0.0
    %v718 = vmax.f32 %v452, 0.0
    %v719 = vmax.f32 %v455, 0.0
    %v720 = vmax.f32 %v458, 0.0
    %v721 = vmax.f32 %v461, 0.0
    %v722 = vmax.f32 %v464, 0.0
    %v723 = vmax.f32 %v467, 0.0
    %v724 = vmax.f32 %v470, 0.0
    %v725 = vmax.f32 %v473, 0.0
    %v726 = vmax.f32 %v476, 0.0
    %v727 = vmax.f32 %v479, 0.0
    %v728 = vmax.f32 %v482, 0.0
    %v729 = vmax.f32 %v485, 0.0
    %v730 = vmax.f32 %v488, 0.0
    %v731 = vmax.f32 %v491, 0.0
    %v732 = vmax.f32 %v494, 0.0
    %v733 = vmax.f32 %v497, 0.0
    %v734 = vmax.f32 %v500, 0.0
    %v735 = vmax.f32 %v503, 0.0
    %v736 = vmax.f32 %v506, 0.0
    %v737 = vmax.f32 %v509, 0.0
    %v738 = vmax.f32 %v512, 0.0
    %v739 = vmax.f32 %v515, 0.0
    %v740 = vmax.f32 %v518, 0.0
    %v741 = vmax.f32 %v521, 0.0
    %v742 = vmax.f32 %v524, 0.0
    %v743 = vmax.f32 %v527, 0.0
    %v744 = vmax.f32 %v530, 0.0
    %v745 = vmax.f32 %v533, 0.0
    %v746 = vmax.f32 %v536, 0.0
    %v747 = vmax.f32 %v539, 0.0
    %v748 = vmax.f32 %v542, 0.0
    %v749 = vmax.f32 %v545, 0.0
    %v750 = vmax.f32 %v548, 0.0
    %v751 = vmax.f32 %v551, 0.0
    %v752 = vmax.f32 %v554, 0.0
    %v753 = vmax.f32 %v557, 0.0
    %v754 = vmax.f32 %v560, 0.0
    %v755 = vmax.f32 %v563, 0.0
    %v756 = vmax.f32 %v566, 0.0
    %v757 = vmax.f32 %v569, 0.0
    %v758 = vmax.f32 %v572, 0.0
    %v759 = vmax.f32 %v575, 0.0
    %v760 = vmax.f32 %v578, 0.0
    %v761 = vmax.f32 %v581, 0.0
    %v762 = vmax.f32 %v584, 0.0
    %v763 = vmax.f32 %v587, 0.0
    %v764 = vmax.f32 %v590, 0.0
    %v765 = vmax.f32 %v593, 0.0
    %v766 = vmax.f32 %v596, 0.0
    %v767 = vmax.f32 %v599, 0.0
    %v768 = vmax.f32 %v602, 0.0
    %v769 = vmax.f32 %v605, 0.0
    %v770 = vmax.f32 %v608, 0.0
    %v771 = vmax.f32 %v611, 0.0
    %v772 = vmax.f32 %v614, 0.0
    %v773 = vmax.f32 %v617, 0.0
    %v774 = vmax.f32 %v620, 0.0
    %v775 = vmax.f32 %v623, 0.0
    %v776 = vmax.f32 %v626, 0.0
    %v777 = vmax.f32 %v629, 0.0
    %v778 = vmax.f32 %v632, 0.0
    %v779 = vmax.f32 %v635, 0.0
    %v780 = vmax.f32 %v638, 0.0
    %v781 = vmax.f32 %v641, 0.0
    %v782 = vmax.f32 %v644, 0.0
    %v783 = vmax.f32 %v647, 0.0
    %v784 = vmax.f32 %v650, 0.0
    %v785 = vmax.f32 %v653, 0.0
    %v786 = vmax.f32 %v656, 0.0
    %v787 = vmax.f32 %v659, 0.0
    %v788 = vrsqrt.pop %v660
    %v789 = vmul.f32 %v788, %v660
    %v790 = vmul.f32 %v789, %v788
    %v791 = vmul.f32 0.5, %v790
    %v792 = vsub.f32 1.5, %v791
    %v793 = vmul.f32 %v788, %v792
    %v794 = vmul.f32 %v660, %v793
    %vm795 = vcmp.eq.f32.partialorder %v660, inf
    %v796 = vsel %vm795, %v660, %v794
    %vm797 = vcmp.eq.f32.partialorder %v660, 0.0
    %v798 = vand.u32 %v660, 2147483648
    %v799 = vsel %vm797, %v798, %v796
    %v800 = vrsqrt.pop %v661
    %v801 = vmul.f32 %v800, %v661
    %v802 = vmul.f32 %v801, %v800
    %v803 = vmul.f32 0.5, %v802
    %v804 = vsub.f32 1.5, %v803
    %v805 = vmul.f32 %v800, %v804
    %v806 = vmul.f32 %v661, %v805
    %vm807 = vcmp.eq.f32.partialorder %v661, inf
    %v808 = vsel %vm807, %v661, %v806
    %vm809 = vcmp.eq.f32.partialorder %v661, 0.0
    %v810 = vand.u32 %v661, 2147483648
    %v811 = vsel %vm809, %v810, %v808
    %v812 = vrsqrt.pop %v662
    %v813 = vmul.f32 %v812, %v662
    %v814 = vmul.f32 %v813, %v812
    %v815 = vmul.f32 0.5, %v814
    %v816 = vsub.f32 1.5, %v815
    %v817 = vmul.f32 %v812, %v816
    %v818 = vmul.f32 %v662, %v817
    %vm819 = vcmp.eq.f32.partialorder %v662, inf
    %v820 = vsel %vm819, %v662, %v818
    %vm821 = vcmp.eq.f32.partialorder %v662, 0.0
    %v822 = vand.u32 %v662, 2147483648
    %v823 = vsel %vm821, %v822, %v820
    %v824 = vrsqrt.pop %v663
    %v825 = vmul.f32 %v824, %v663
    %v826 = vmul.f32 %v825, %v824
    %v827 = vmul.f32 0.5, %v826
    %v828 = vsub.f32 1.5, %v827
    %v829 = vmul.f32 %v824, %v828
    %v830 = vmul.f32 %v663, %v829
    %vm831 = vcmp.eq.f32.partialorder %v663, inf
    %v832 = vsel %vm831, %v663, %v830
    %vm833 = vcmp.eq.f32.partialorder %v663, 0.0
    %v834 = vand.u32 %v663, 2147483648
    %v835 = vsel %vm833, %v834, %v832
    %v836 = vrsqrt.pop %v664
    %v837 = vmul.f32 %v836, %v664
    %v838 = vmul.f32 %v837, %v836
    %v839 = vmul.f32 0.5, %v838
    %v840 = vsub.f32 1.5, %v839
    %v841 = vmul.f32 %v836, %v840
    %v842 = vmul.f32 %v664, %v841
    %vm843 = vcmp.eq.f32.partialorder %v664, inf
    %v844 = vsel %vm843, %v664, %v842
    %vm845 = vcmp.eq.f32.partialorder %v664, 0.0
    %v846 = vand.u32 %v664, 2147483648
    %v847 = vsel %vm845, %v846, %v844
    %v848 = vrsqrt.pop %v665
    %v849 = vmul.f32 %v848, %v665
    %v850 = vmul.f32 %v849, %v848
    %v851 = vmul.f32 0.5, %v850
    %v852 = vsub.f32 1.5, %v851
    %v853 = vmul.f32 %v848, %v852
    %v854 = vmul.f32 %v665, %v853
    %vm855 = vcmp.eq.f32.partialorder %v665, inf
    %v856 = vsel %vm855, %v665, %v854
    %vm857 = vcmp.eq.f32.partialorder %v665, 0.0
    %v858 = vand.u32 %v665, 2147483648
    %v859 = vsel %vm857, %v858, %v856
    %v860 = vrsqrt.pop %v666
    %v861 = vmul.f32 %v860, %v666
    %v862 = vmul.f32 %v861, %v860
    %v863 = vmul.f32 0.5, %v862
    %v864 = vsub.f32 1.5, %v863
    %v865 = vmul.f32 %v860, %v864
    %v866 = vmul.f32 %v666, %v865
    %vm867 = vcmp.eq.f32.partialorder %v666, inf
    %v868 = vsel %vm867, %v666, %v866
    %vm869 = vcmp.eq.f32.partialorder %v666, 0.0
    %v870 = vand.u32 %v666, 2147483648
    %v871 = vsel %vm869, %v870, %v868
    %v872 = vrsqrt.pop %v667
    %v873 = vmul.f32 %v872, %v667
    %v874 = vmul.f32 %v873, %v872
    %v875 = vmul.f32 0.5, %v874
    %v876 = vsub.f32 1.5, %v875
    %v877 = vmul.f32 %v872, %v876
    %v878 = vmul.f32 %v667, %v877
    %vm879 = vcmp.eq.f32.partialorder %v667, inf
    %v880 = vsel %vm879, %v667, %v878
    %vm881 = vcmp.eq.f32.partialorder %v667, 0.0
    %v882 = vand.u32 %v667, 2147483648
    %v883 = vsel %vm881, %v882, %v880
    %v884 = vrsqrt.pop %v668
    %v885 = vmul.f32 %v884, %v668
    %v886 = vmul.f32 %v885, %v884
    %v887 = vmul.f32 0.5, %v886
    %v888 = vsub.f32 1.5, %v887
    %v889 = vmul.f32 %v884, %v888
    %v890 = vmul.f32 %v668, %v889
    %vm891 = vcmp.eq.f32.partialorder %v668, inf
    %v892 = vsel %vm891, %v668, %v890
    %vm893 = vcmp.eq.f32.partialorder %v668, 0.0
    %v894 = vand.u32 %v668, 2147483648
    %v895 = vsel %vm893, %v894, %v892
    %v896 = vrsqrt.pop %v669
    %v897 = vmul.f32 %v896, %v669
    %v898 = vmul.f32 %v897, %v896
    %v899 = vmul.f32 0.5, %v898
    %v900 = vsub.f32 1.5, %v899
    %v901 = vmul.f32 %v896, %v900
    %v902 = vmul.f32 %v669, %v901
    %vm903 = vcmp.eq.f32.partialorder %v669, inf
    %v904 = vsel %vm903, %v669, %v902
    %vm905 = vcmp.eq.f32.partialorder %v669, 0.0
    %v906 = vand.u32 %v669, 2147483648
    %v907 = vsel %vm905, %v906, %v904
    %v908 = vrsqrt.pop %v670
    %v909 = vmul.f32 %v908, %v670
    %v910 = vmul.f32 %v909, %v908
    %v911 = vmul.f32 0.5, %v910
    %v912 = vsub.f32 1.5, %v911
    %v913 = vmul.f32 %v908, %v912
    %v914 = vmul.f32 %v670, %v913
    %vm915 = vcmp.eq.f32.partialorder %v670, inf
    %v916 = vsel %vm915, %v670, %v914
    %vm917 = vcmp.eq.f32.partialorder %v670, 0.0
    %v918 = vand.u32 %v670, 2147483648
    %v919 = vsel %vm917, %v918, %v916
    %v920 = vrsqrt.pop %v671
    %v921 = vmul.f32 %v920, %v671
    %v922 = vmul.f32 %v921, %v920
    %v923 = vmul.f32 0.5, %v922
    %v924 = vsub.f32 1.5, %v923
    %v925 = vmul.f32 %v920, %v924
    %v926 = vmul.f32 %v671, %v925
    %vm927 = vcmp.eq.f32.partialorder %v671, inf
    %v928 = vsel %vm927, %v671, %v926
    %vm929 = vcmp.eq.f32.partialorder %v671, 0.0
    %v930 = vand.u32 %v671, 2147483648
    %v931 = vsel %vm929, %v930, %v928
    %v932 = vrsqrt.pop %v672
    %v933 = vmul.f32 %v932, %v672
    %v934 = vmul.f32 %v933, %v932
    %v935 = vmul.f32 0.5, %v934
    %v936 = vsub.f32 1.5, %v935
    %v937 = vmul.f32 %v932, %v936
    %v938 = vmul.f32 %v672, %v937
    %vm939 = vcmp.eq.f32.partialorder %v672, inf
    %v940 = vsel %vm939, %v672, %v938
    %vm941 = vcmp.eq.f32.partialorder %v672, 0.0
    %v942 = vand.u32 %v672, 2147483648
    %v943 = vsel %vm941, %v942, %v940
    %v944 = vrsqrt.pop %v673
    %v945 = vmul.f32 %v944, %v673
    %v946 = vmul.f32 %v945, %v944
    %v947 = vmul.f32 0.5, %v946
    %v948 = vsub.f32 1.5, %v947
    %v949 = vmul.f32 %v944, %v948
    %v950 = vmul.f32 %v673, %v949
    %vm951 = vcmp.eq.f32.partialorder %v673, inf
    %v952 = vsel %vm951, %v673, %v950
    %vm953 = vcmp.eq.f32.partialorder %v673, 0.0
    %v954 = vand.u32 %v673, 2147483648
    %v955 = vsel %vm953, %v954, %v952
    %v956 = vrsqrt.pop %v674
    %v957 = vmul.f32 %v956, %v674
    %v958 = vmul.f32 %v957, %v956
    %v959 = vmul.f32 0.5, %v958
    %v960 = vsub.f32 1.5, %v959
    %v961 = vmul.f32 %v956, %v960
    %v962 = vmul.f32 %v674, %v961
    %vm963 = vcmp.eq.f32.partialorder %v674, inf
    %v964 = vsel %vm963, %v674, %v962
    %vm965 = vcmp.eq.f32.partialorder %v674, 0.0
    %v966 = vand.u32 %v674, 2147483648
    %v967 = vsel %vm965, %v966, %v964
    %v968 = vrsqrt.pop %v675
    %v969 = vmul.f32 %v968, %v675
    %v970 = vmul.f32 %v969, %v968
    %v971 = vmul.f32 0.5, %v970
    %v972 = vsub.f32 1.5, %v971
    %v973 = vmul.f32 %v968, %v972
    %v974 = vmul.f32 %v675, %v973
    %vm975 = vcmp.eq.f32.partialorder %v675, inf
    %v976 = vsel %vm975, %v675, %v974
    %vm977 = vcmp.eq.f32.partialorder %v675, 0.0
    %v978 = vand.u32 %v675, 2147483648
    %v979 = vsel %vm977, %v978, %v976
    %v980 = vrsqrt.pop %v676
    %v981 = vmul.f32 %v980, %v676
    %v982 = vmul.f32 %v981, %v980
    %v983 = vmul.f32 0.5, %v982
    %v984 = vsub.f32 1.5, %v983
    %v985 = vmul.f32 %v980, %v984
    %v986 = vmul.f32 %v676, %v985
    %vm987 = vcmp.eq.f32.partialorder %v676, inf
    %v988 = vsel %vm987, %v676, %v986
    %vm989 = vcmp.eq.f32.partialorder %v676, 0.0
    %v990 = vand.u32 %v676, 2147483648
    %v991 = vsel %vm989, %v990, %v988
    %v992 = vrsqrt.pop %v677
    %v993 = vmul.f32 %v992, %v677
    %v994 = vmul.f32 %v993, %v992
    %v995 = vmul.f32 0.5, %v994
    %v996 = vsub.f32 1.5, %v995
    %v997 = vmul.f32 %v992, %v996
    %v998 = vmul.f32 %v677, %v997
    %vm999 = vcmp.eq.f32.partialorder %v677, inf
    %v1000 = vsel %vm999, %v677, %v998
    %vm1001 = vcmp.eq.f32.partialorder %v677, 0.0
    %v1002 = vand.u32 %v677, 2147483648
    %v1003 = vsel %vm1001, %v1002, %v1000
    %v1004 = vrsqrt.pop %v678
    %v1005 = vmul.f32 %v1004, %v678
    %v1006 = vmul.f32 %v1005, %v1004
    %v1007 = vmul.f32 0.5, %v1006
    %v1008 = vsub.f32 1.5, %v1007
    %v1009 = vmul.f32 %v1004, %v1008
    %v1010 = vmul.f32 %v678, %v1009
    %vm1011 = vcmp.eq.f32.partialorder %v678, inf
    %v1012 = vsel %vm1011, %v678, %v1010
    %vm1013 = vcmp.eq.f32.partialorder %v678, 0.0
    %v1014 = vand.u32 %v678, 2147483648
    %v1015 = vsel %vm1013, %v1014, %v1012
    %v1016 = vrsqrt.pop %v679
    %v1017 = vmul.f32 %v1016, %v679
    %v1018 = vmul.f32 %v1017, %v1016
    %v1019 = vmul.f32 0.5, %v1018
    %v1020 = vsub.f32 1.5, %v1019
    %v1021 = vmul.f32 %v1016, %v1020
    %v1022 = vmul.f32 %v679, %v1021
    %vm1023 = vcmp.eq.f32.partialorder %v679, inf
    %v1024 = vsel %vm1023, %v679, %v1022
    %vm1025 = vcmp.eq.f32.partialorder %v679, 0.0
    %v1026 = vand.u32 %v679, 2147483648
    %v1027 = vsel %vm1025, %v1026, %v1024
    %v1028 = vrsqrt.pop %v680
    %v1029 = vmul.f32 %v1028, %v680
    %v1030 = vmul.f32 %v1029, %v1028
    %v1031 = vmul.f32 0.5, %v1030
    %v1032 = vsub.f32 1.5, %v1031
    %v1033 = vmul.f32 %v1028, %v1032
    %v1034 = vmul.f32 %v680, %v1033
    %vm1035 = vcmp.eq.f32.partialorder %v680, inf
    %v1036 = vsel %vm1035, %v680, %v1034
    %vm1037 = vcmp.eq.f32.partialorder %v680, 0.0
    %v1038 = vand.u32 %v680, 2147483648
    %v1039 = vsel %vm1037, %v1038, %v1036
    %v1040 = vrsqrt.pop %v681
    %v1041 = vmul.f32 %v1040, %v681
    %v1042 = vmul.f32 %v1041, %v1040
    %v1043 = vmul.f32 0.5, %v1042
    %v1044 = vsub.f32 1.5, %v1043
    %v1045 = vmul.f32 %v1040, %v1044
    %v1046 = vmul.f32 %v681, %v1045
    %vm1047 = vcmp.eq.f32.partialorder %v681, inf
    %v1048 = vsel %vm1047, %v681, %v1046
    %vm1049 = vcmp.eq.f32.partialorder %v681, 0.0
    %v1050 = vand.u32 %v681, 2147483648
    %v1051 = vsel %vm1049, %v1050, %v1048
    %v1052 = vrsqrt.pop %v682
    %v1053 = vmul.f32 %v1052, %v682
    %v1054 = vmul.f32 %v1053, %v1052
    %v1055 = vmul.f32 0.5, %v1054
    %v1056 = vsub.f32 1.5, %v1055
    %v1057 = vmul.f32 %v1052, %v1056
    %v1058 = vmul.f32 %v682, %v1057
    %vm1059 = vcmp.eq.f32.partialorder %v682, inf
    %v1060 = vsel %vm1059, %v682, %v1058
    %vm1061 = vcmp.eq.f32.partialorder %v682, 0.0
    %v1062 = vand.u32 %v682, 2147483648
    %v1063 = vsel %vm1061, %v1062, %v1060
    %v1064 = vrsqrt.pop %v683
    %v1065 = vmul.f32 %v1064, %v683
    %v1066 = vmul.f32 %v1065, %v1064
    %v1067 = vmul.f32 0.5, %v1066
    %v1068 = vsub.f32 1.5, %v1067
    %v1069 = vmul.f32 %v1064, %v1068
    %v1070 = vmul.f32 %v683, %v1069
    %vm1071 = vcmp.eq.f32.partialorder %v683, inf
    %v1072 = vsel %vm1071, %v683, %v1070
    %vm1073 = vcmp.eq.f32.partialorder %v683, 0.0
    %v1074 = vand.u32 %v683, 2147483648
    %v1075 = vsel %vm1073, %v1074, %v1072
    %v1076 = vrsqrt.pop %v684
    %v1077 = vmul.f32 %v1076, %v684
    %v1078 = vmul.f32 %v1077, %v1076
    %v1079 = vmul.f32 0.5, %v1078
    %v1080 = vsub.f32 1.5, %v1079
    %v1081 = vmul.f32 %v1076, %v1080
    %v1082 = vmul.f32 %v684, %v1081
    %vm1083 = vcmp.eq.f32.partialorder %v684, inf
    %v1084 = vsel %vm1083, %v684, %v1082
    %vm1085 = vcmp.eq.f32.partialorder %v684, 0.0
    %v1086 = vand.u32 %v684, 2147483648
    %v1087 = vsel %vm1085, %v1086, %v1084
    %v1088 = vrsqrt.pop %v685
    %v1089 = vmul.f32 %v1088, %v685
    %v1090 = vmul.f32 %v1089, %v1088
    %v1091 = vmul.f32 0.5, %v1090
    %v1092 = vsub.f32 1.5, %v1091
    %v1093 = vmul.f32 %v1088, %v1092
    %v1094 = vmul.f32 %v685, %v1093
    %vm1095 = vcmp.eq.f32.partialorder %v685, inf
    %v1096 = vsel %vm1095, %v685, %v1094
    %vm1097 = vcmp.eq.f32.partialorder %v685, 0.0
    %v1098 = vand.u32 %v685, 2147483648
    %v1099 = vsel %vm1097, %v1098, %v1096
    %v1100 = vrsqrt.pop %v686
    %v1101 = vmul.f32 %v1100, %v686
    %v1102 = vmul.f32 %v1101, %v1100
    %v1103 = vmul.f32 0.5, %v1102
    %v1104 = vsub.f32 1.5, %v1103
    %v1105 = vmul.f32 %v1100, %v1104
    %v1106 = vmul.f32 %v686, %v1105
    %vm1107 = vcmp.eq.f32.partialorder %v686, inf
    %v1108 = vsel %vm1107, %v686, %v1106
    %vm1109 = vcmp.eq.f32.partialorder %v686, 0.0
    %v1110 = vand.u32 %v686, 2147483648
    %v1111 = vsel %vm1109, %v1110, %v1108
    %v1112 = vrsqrt.pop %v687
    %v1113 = vmul.f32 %v1112, %v687
    %v1114 = vmul.f32 %v1113, %v1112
    %v1115 = vmul.f32 0.5, %v1114
    %v1116 = vsub.f32 1.5, %v1115
    %v1117 = vmul.f32 %v1112, %v1116
    %v1118 = vmul.f32 %v687, %v1117
    %vm1119 = vcmp.eq.f32.partialorder %v687, inf
    %v1120 = vsel %vm1119, %v687, %v1118
    %vm1121 = vcmp.eq.f32.partialorder %v687, 0.0
    %v1122 = vand.u32 %v687, 2147483648
    %v1123 = vsel %vm1121, %v1122, %v1120
    %v1124 = vrsqrt.pop %v688
    %v1125 = vmul.f32 %v1124, %v688
    %v1126 = vmul.f32 %v1125, %v1124
    %v1127 = vmul.f32 0.5, %v1126
    %v1128 = vsub.f32 1.5, %v1127
    %v1129 = vmul.f32 %v1124, %v1128
    %v1130 = vmul.f32 %v688, %v1129
    %vm1131 = vcmp.eq.f32.partialorder %v688, inf
    %v1132 = vsel %vm1131, %v688, %v1130
    %vm1133 = vcmp.eq.f32.partialorder %v688, 0.0
    %v1134 = vand.u32 %v688, 2147483648
    %v1135 = vsel %vm1133, %v1134, %v1132
    %v1136 = vrsqrt.pop %v689
    %v1137 = vmul.f32 %v1136, %v689
    %v1138 = vmul.f32 %v1137, %v1136
    %v1139 = vmul.f32 0.5, %v1138
    %v1140 = vsub.f32 1.5, %v1139
    %v1141 = vmul.f32 %v1136, %v1140
    %v1142 = vmul.f32 %v689, %v1141
    %vm1143 = vcmp.eq.f32.partialorder %v689, inf
    %v1144 = vsel %vm1143, %v689, %v1142
    %vm1145 = vcmp.eq.f32.partialorder %v689, 0.0
    %v1146 = vand.u32 %v689, 2147483648
    %v1147 = vsel %vm1145, %v1146, %v1144
    %v1148 = vrsqrt.pop %v690
    %v1149 = vmul.f32 %v1148, %v690
    %v1150 = vmul.f32 %v1149, %v1148
    %v1151 = vmul.f32 0.5, %v1150
    %v1152 = vsub.f32 1.5, %v1151
    %v1153 = vmul.f32 %v1148, %v1152
    %v1154 = vmul.f32 %v690, %v1153
    %vm1155 = vcmp.eq.f32.partialorder %v690, inf
    %v1156 = vsel %vm1155, %v690, %v1154
    %vm1157 = vcmp.eq.f32.partialorder %v690, 0.0
    %v1158 = vand.u32 %v690, 2147483648
    %v1159 = vsel %vm1157, %v1158, %v1156
    %v1160 = vrsqrt.pop %v691
    %v1161 = vmul.f32 %v1160, %v691
    %v1162 = vmul.f32 %v1161, %v1160
    %v1163 = vmul.f32 0.5, %v1162
    %v1164 = vsub.f32 1.5, %v1163
    %v1165 = vmul.f32 %v1160, %v1164
    %v1166 = vmul.f32 %v691, %v1165
    %vm1167 = vcmp.eq.f32.partialorder %v691, inf
    %v1168 = vsel %vm1167, %v691, %v1166
    %vm1169 = vcmp.eq.f32.partialorder %v691, 0.0
    %v1170 = vand.u32 %v691, 2147483648
    %v1171 = vsel %vm1169, %v1170, %v1168
    %v1172 = vrsqrt.pop %v692
    %v1173 = vmul.f32 %v1172, %v692
    %v1174 = vmul.f32 %v1173, %v1172
    %v1175 = vmul.f32 0.5, %v1174
    %v1176 = vsub.f32 1.5, %v1175
    %v1177 = vmul.f32 %v1172, %v1176
    %v1178 = vmul.f32 %v692, %v1177
    %vm1179 = vcmp.eq.f32.partialorder %v692, inf
    %v1180 = vsel %vm1179, %v692, %v1178
    %vm1181 = vcmp.eq.f32.partialorder %v692, 0.0
    %v1182 = vand.u32 %v692, 2147483648
    %v1183 = vsel %vm1181, %v1182, %v1180
    %v1184 = vrsqrt.pop %v693
    %v1185 = vmul.f32 %v1184, %v693
    %v1186 = vmul.f32 %v1185, %v1184
    %v1187 = vmul.f32 0.5, %v1186
    %v1188 = vsub.f32 1.5, %v1187
    %v1189 = vmul.f32 %v1184, %v1188
    %v1190 = vmul.f32 %v693, %v1189
    %vm1191 = vcmp.eq.f32.partialorder %v693, inf
    %v1192 = vsel %vm1191, %v693, %v1190
    %vm1193 = vcmp.eq.f32.partialorder %v693, 0.0
    %v1194 = vand.u32 %v693, 2147483648
    %v1195 = vsel %vm1193, %v1194, %v1192
    %v1196 = vrsqrt.pop %v694
    %v1197 = vmul.f32 %v1196, %v694
    %v1198 = vmul.f32 %v1197, %v1196
    %v1199 = vmul.f32 0.5, %v1198
    %v1200 = vsub.f32 1.5, %v1199
    %v1201 = vmul.f32 %v1196, %v1200
    %v1202 = vmul.f32 %v694, %v1201
    %vm1203 = vcmp.eq.f32.partialorder %v694, inf
    %v1204 = vsel %vm1203, %v694, %v1202
    %vm1205 = vcmp.eq.f32.partialorder %v694, 0.0
    %v1206 = vand.u32 %v694, 2147483648
    %v1207 = vsel %vm1205, %v1206, %v1204
    %v1208 = vrsqrt.pop %v695
    %v1209 = vmul.f32 %v1208, %v695
    %v1210 = vmul.f32 %v1209, %v1208
    %v1211 = vmul.f32 0.5, %v1210
    %v1212 = vsub.f32 1.5, %v1211
    %v1213 = vmul.f32 %v1208, %v1212
    %v1214 = vmul.f32 %v695, %v1213
    %vm1215 = vcmp.eq.f32.partialorder %v695, inf
    %v1216 = vsel %vm1215, %v695, %v1214
    %vm1217 = vcmp.eq.f32.partialorder %v695, 0.0
    %v1218 = vand.u32 %v695, 2147483648
    %v1219 = vsel %vm1217, %v1218, %v1216
    %v1220 = vrsqrt.pop %v696
    %v1221 = vmul.f32 %v1220, %v696
    %v1222 = vmul.f32 %v1221, %v1220
    %v1223 = vmul.f32 0.5, %v1222
    %v1224 = vsub.f32 1.5, %v1223
    %v1225 = vmul.f32 %v1220, %v1224
    %v1226 = vmul.f32 %v696, %v1225
    %vm1227 = vcmp.eq.f32.partialorder %v696, inf
    %v1228 = vsel %vm1227, %v696, %v1226
    %vm1229 = vcmp.eq.f32.partialorder %v696, 0.0
    %v1230 = vand.u32 %v696, 2147483648
    %v1231 = vsel %vm1229, %v1230, %v1228
    %v1232 = vrsqrt.pop %v697
    %v1233 = vmul.f32 %v1232, %v697
    %v1234 = vmul.f32 %v1233, %v1232
    %v1235 = vmul.f32 0.5, %v1234
    %v1236 = vsub.f32 1.5, %v1235
    %v1237 = vmul.f32 %v1232, %v1236
    %v1238 = vmul.f32 %v697, %v1237
    %vm1239 = vcmp.eq.f32.partialorder %v697, inf
    %v1240 = vsel %vm1239, %v697, %v1238
    %vm1241 = vcmp.eq.f32.partialorder %v697, 0.0
    %v1242 = vand.u32 %v697, 2147483648
    %v1243 = vsel %vm1241, %v1242, %v1240
    %v1244 = vrsqrt.pop %v698
    %v1245 = vmul.f32 %v1244, %v698
    %v1246 = vmul.f32 %v1245, %v1244
    %v1247 = vmul.f32 0.5, %v1246
    %v1248 = vsub.f32 1.5, %v1247
    %v1249 = vmul.f32 %v1244, %v1248
    %v1250 = vmul.f32 %v698, %v1249
    %vm1251 = vcmp.eq.f32.partialorder %v698, inf
    %v1252 = vsel %vm1251, %v698, %v1250
    %vm1253 = vcmp.eq.f32.partialorder %v698, 0.0
    %v1254 = vand.u32 %v698, 2147483648
    %v1255 = vsel %vm1253, %v1254, %v1252
    %v1256 = vrsqrt.pop %v699
    %v1257 = vmul.f32 %v1256, %v699
    %v1258 = vmul.f32 %v1257, %v1256
    %v1259 = vmul.f32 0.5, %v1258
    %v1260 = vsub.f32 1.5, %v1259
    %v1261 = vmul.f32 %v1256, %v1260
    %v1262 = vmul.f32 %v699, %v1261
    %vm1263 = vcmp.eq.f32.partialorder %v699, inf
    %v1264 = vsel %vm1263, %v699, %v1262
    %vm1265 = vcmp.eq.f32.partialorder %v699, 0.0
    %v1266 = vand.u32 %v699, 2147483648
    %v1267 = vsel %vm1265, %v1266, %v1264
    %v1268 = vrsqrt.pop %v700
    %v1269 = vmul.f32 %v1268, %v700
    %v1270 = vmul.f32 %v1269, %v1268
    %v1271 = vmul.f32 0.5, %v1270
    %v1272 = vsub.f32 1.5, %v1271
    %v1273 = vmul.f32 %v1268, %v1272
    %v1274 = vmul.f32 %v700, %v1273
    %vm1275 = vcmp.eq.f32.partialorder %v700, inf
    %v1276 = vsel %vm1275, %v700, %v1274
    %vm1277 = vcmp.eq.f32.partialorder %v700, 0.0
    %v1278 = vand.u32 %v700, 2147483648
    %v1279 = vsel %vm1277, %v1278, %v1276
    %v1280 = vrsqrt.pop %v701
    %v1281 = vmul.f32 %v1280, %v701
    %v1282 = vmul.f32 %v1281, %v1280
    %v1283 = vmul.f32 0.5, %v1282
    %v1284 = vsub.f32 1.5, %v1283
    %v1285 = vmul.f32 %v1280, %v1284
    %v1286 = vmul.f32 %v701, %v1285
    %vm1287 = vcmp.eq.f32.partialorder %v701, inf
    %v1288 = vsel %vm1287, %v701, %v1286
    %vm1289 = vcmp.eq.f32.partialorder %v701, 0.0
    %v1290 = vand.u32 %v701, 2147483648
    %v1291 = vsel %vm1289, %v1290, %v1288
    %v1292 = vrsqrt.pop %v702
    %v1293 = vmul.f32 %v1292, %v702
    %v1294 = vmul.f32 %v1293, %v1292
    %v1295 = vmul.f32 0.5, %v1294
    %v1296 = vsub.f32 1.5, %v1295
    %v1297 = vmul.f32 %v1292, %v1296
    %v1298 = vmul.f32 %v702, %v1297
    %vm1299 = vcmp.eq.f32.partialorder %v702, inf
    %v1300 = vsel %vm1299, %v702, %v1298
    %vm1301 = vcmp.eq.f32.partialorder %v702, 0.0
    %v1302 = vand.u32 %v702, 2147483648
    %v1303 = vsel %vm1301, %v1302, %v1300
    %v1304 = vrsqrt.pop %v703
    %v1305 = vmul.f32 %v1304, %v703
    %v1306 = vmul.f32 %v1305, %v1304
    %v1307 = vmul.f32 0.5, %v1306
    %v1308 = vsub.f32 1.5, %v1307
    %v1309 = vmul.f32 %v1304, %v1308
    %v1310 = vmul.f32 %v703, %v1309
    %vm1311 = vcmp.eq.f32.partialorder %v703, inf
    %v1312 = vsel %vm1311, %v703, %v1310
    %vm1313 = vcmp.eq.f32.partialorder %v703, 0.0
    %v1314 = vand.u32 %v703, 2147483648
    %v1315 = vsel %vm1313, %v1314, %v1312
    %v1316 = vrsqrt.pop %v704
    %v1317 = vmul.f32 %v1316, %v704
    %v1318 = vmul.f32 %v1317, %v1316
    %v1319 = vmul.f32 0.5, %v1318
    %v1320 = vsub.f32 1.5, %v1319
    %v1321 = vmul.f32 %v1316, %v1320
    %v1322 = vmul.f32 %v704, %v1321
    %vm1323 = vcmp.eq.f32.partialorder %v704, inf
    %v1324 = vsel %vm1323, %v704, %v1322
    %vm1325 = vcmp.eq.f32.partialorder %v704, 0.0
    %v1326 = vand.u32 %v704, 2147483648
    %v1327 = vsel %vm1325, %v1326, %v1324
    %v1328 = vrsqrt.pop %v705
    %v1329 = vmul.f32 %v1328, %v705
    %v1330 = vmul.f32 %v1329, %v1328
    %v1331 = vmul.f32 0.5, %v1330
    %v1332 = vsub.f32 1.5, %v1331
    %v1333 = vmul.f32 %v1328, %v1332
    %v1334 = vmul.f32 %v705, %v1333
    %vm1335 = vcmp.eq.f32.partialorder %v705, inf
    %v1336 = vsel %vm1335, %v705, %v1334
    %vm1337 = vcmp.eq.f32.partialorder %v705, 0.0
    %v1338 = vand.u32 %v705, 2147483648
    %v1339 = vsel %vm1337, %v1338, %v1336
    %v1340 = vrsqrt.pop %v706
    %v1341 = vmul.f32 %v1340, %v706
    %v1342 = vmul.f32 %v1341, %v1340
    %v1343 = vmul.f32 0.5, %v1342
    %v1344 = vsub.f32 1.5, %v1343
    %v1345 = vmul.f32 %v1340, %v1344
    %v1346 = vmul.f32 %v706, %v1345
    %vm1347 = vcmp.eq.f32.partialorder %v706, inf
    %v1348 = vsel %vm1347, %v706, %v1346
    %vm1349 = vcmp.eq.f32.partialorder %v706, 0.0
    %v1350 = vand.u32 %v706, 2147483648
    %v1351 = vsel %vm1349, %v1350, %v1348
    %v1352 = vrsqrt.pop %v707
    %v1353 = vmul.f32 %v1352, %v707
    %v1354 = vmul.f32 %v1353, %v1352
    %v1355 = vmul.f32 0.5, %v1354
    %v1356 = vsub.f32 1.5, %v1355
    %v1357 = vmul.f32 %v1352, %v1356
    %v1358 = vmul.f32 %v707, %v1357
    %vm1359 = vcmp.eq.f32.partialorder %v707, inf
    %v1360 = vsel %vm1359, %v707, %v1358
    %vm1361 = vcmp.eq.f32.partialorder %v707, 0.0
    %v1362 = vand.u32 %v707, 2147483648
    %v1363 = vsel %vm1361, %v1362, %v1360
    %v1364 = vrsqrt.pop %v708
    %v1365 = vmul.f32 %v1364, %v708
    %v1366 = vmul.f32 %v1365, %v1364
    %v1367 = vmul.f32 0.5, %v1366
    %v1368 = vsub.f32 1.5, %v1367
    %v1369 = vmul.f32 %v1364, %v1368
    %v1370 = vmul.f32 %v708, %v1369
    %vm1371 = vcmp.eq.f32.partialorder %v708, inf
    %v1372 = vsel %vm1371, %v708, %v1370
    %vm1373 = vcmp.eq.f32.partialorder %v708, 0.0
    %v1374 = vand.u32 %v708, 2147483648
    %v1375 = vsel %vm1373, %v1374, %v1372
    %v1376 = vrsqrt.pop %v709
    %v1377 = vmul.f32 %v1376, %v709
    %v1378 = vmul.f32 %v1377, %v1376
    %v1379 = vmul.f32 0.5, %v1378
    %v1380 = vsub.f32 1.5, %v1379
    %v1381 = vmul.f32 %v1376, %v1380
    %v1382 = vmul.f32 %v709, %v1381
    %vm1383 = vcmp.eq.f32.partialorder %v709, inf
    %v1384 = vsel %vm1383, %v709, %v1382
    %vm1385 = vcmp.eq.f32.partialorder %v709, 0.0
    %v1386 = vand.u32 %v709, 2147483648
    %v1387 = vsel %vm1385, %v1386, %v1384
    %v1388 = vrsqrt.pop %v710
    %v1389 = vmul.f32 %v1388, %v710
    %v1390 = vmul.f32 %v1389, %v1388
    %v1391 = vmul.f32 0.5, %v1390
    %v1392 = vsub.f32 1.5, %v1391
    %v1393 = vmul.f32 %v1388, %v1392
    %v1394 = vmul.f32 %v710, %v1393
    %vm1395 = vcmp.eq.f32.partialorder %v710, inf
    %v1396 = vsel %vm1395, %v710, %v1394
    %vm1397 = vcmp.eq.f32.partialorder %v710, 0.0
    %v1398 = vand.u32 %v710, 2147483648
    %v1399 = vsel %vm1397, %v1398, %v1396
    %v1400 = vrsqrt.pop %v711
    %v1401 = vmul.f32 %v1400, %v711
    %v1402 = vmul.f32 %v1401, %v1400
    %v1403 = vmul.f32 0.5, %v1402
    %v1404 = vsub.f32 1.5, %v1403
    %v1405 = vmul.f32 %v1400, %v1404
    %v1406 = vmul.f32 %v711, %v1405
    %vm1407 = vcmp.eq.f32.partialorder %v711, inf
    %v1408 = vsel %vm1407, %v711, %v1406
    %vm1409 = vcmp.eq.f32.partialorder %v711, 0.0
    %v1410 = vand.u32 %v711, 2147483648
    %v1411 = vsel %vm1409, %v1410, %v1408
    %v1412 = vrsqrt.pop %v712
    %v1413 = vmul.f32 %v1412, %v712
    %v1414 = vmul.f32 %v1413, %v1412
    %v1415 = vmul.f32 0.5, %v1414
    %v1416 = vsub.f32 1.5, %v1415
    %v1417 = vmul.f32 %v1412, %v1416
    %v1418 = vmul.f32 %v712, %v1417
    %vm1419 = vcmp.eq.f32.partialorder %v712, inf
    %v1420 = vsel %vm1419, %v712, %v1418
    %vm1421 = vcmp.eq.f32.partialorder %v712, 0.0
    %v1422 = vand.u32 %v712, 2147483648
    %v1423 = vsel %vm1421, %v1422, %v1420
    %v1424 = vrsqrt.pop %v713
    %v1425 = vmul.f32 %v1424, %v713
    %v1426 = vmul.f32 %v1425, %v1424
    %v1427 = vmul.f32 0.5, %v1426
    %v1428 = vsub.f32 1.5, %v1427
    %v1429 = vmul.f32 %v1424, %v1428
    %v1430 = vmul.f32 %v713, %v1429
    %vm1431 = vcmp.eq.f32.partialorder %v713, inf
    %v1432 = vsel %vm1431, %v713, %v1430
    %vm1433 = vcmp.eq.f32.partialorder %v713, 0.0
    %v1434 = vand.u32 %v713, 2147483648
    %v1435 = vsel %vm1433, %v1434, %v1432
    %v1436 = vrsqrt.pop %v714
    %v1437 = vmul.f32 %v1436, %v714
    %v1438 = vmul.f32 %v1437, %v1436
    %v1439 = vmul.f32 0.5, %v1438
    %v1440 = vsub.f32 1.5, %v1439
    %v1441 = vmul.f32 %v1436, %v1440
    %v1442 = vmul.f32 %v714, %v1441
    %vm1443 = vcmp.eq.f32.partialorder %v714, inf
    %v1444 = vsel %vm1443, %v714, %v1442
    %vm1445 = vcmp.eq.f32.partialorder %v714, 0.0
    %v1446 = vand.u32 %v714, 2147483648
    %v1447 = vsel %vm1445, %v1446, %v1444
    %v1448 = vrsqrt.pop %v715
    %v1449 = vmul.f32 %v1448, %v715
    %v1450 = vmul.f32 %v1449, %v1448
    %v1451 = vmul.f32 0.5, %v1450
    %v1452 = vsub.f32 1.5, %v1451
    %v1453 = vmul.f32 %v1448, %v1452
    %v1454 = vmul.f32 %v715, %v1453
    %vm1455 = vcmp.eq.f32.partialorder %v715, inf
    %v1456 = vsel %vm1455, %v715, %v1454
    %vm1457 = vcmp.eq.f32.partialorder %v715, 0.0
    %v1458 = vand.u32 %v715, 2147483648
    %v1459 = vsel %vm1457, %v1458, %v1456
    %v1460 = vrsqrt.pop %v716
    %v1461 = vmul.f32 %v1460, %v716
    %v1462 = vmul.f32 %v1461, %v1460
    %v1463 = vmul.f32 0.5, %v1462
    %v1464 = vsub.f32 1.5, %v1463
    %v1465 = vmul.f32 %v1460, %v1464
    %v1466 = vmul.f32 %v716, %v1465
    %vm1467 = vcmp.eq.f32.partialorder %v716, inf
    %v1468 = vsel %vm1467, %v716, %v1466
    %vm1469 = vcmp.eq.f32.partialorder %v716, 0.0
    %v1470 = vand.u32 %v716, 2147483648
    %v1471 = vsel %vm1469, %v1470, %v1468
    %v1472 = vrsqrt.pop %v717
    %v1473 = vmul.f32 %v1472, %v717
    %v1474 = vmul.f32 %v1473, %v1472
    %v1475 = vmul.f32 0.5, %v1474
    %v1476 = vsub.f32 1.5, %v1475
    %v1477 = vmul.f32 %v1472, %v1476
    %v1478 = vmul.f32 %v717, %v1477
    %vm1479 = vcmp.eq.f32.partialorder %v717, inf
    %v1480 = vsel %vm1479, %v717, %v1478
    %vm1481 = vcmp.eq.f32.partialorder %v717, 0.0
    %v1482 = vand.u32 %v717, 2147483648
    %v1483 = vsel %vm1481, %v1482, %v1480
    %v1484 = vrsqrt.pop %v718
    %v1485 = vmul.f32 %v1484, %v718
    %v1486 = vmul.f32 %v1485, %v1484
    %v1487 = vmul.f32 0.5, %v1486
    %v1488 = vsub.f32 1.5, %v1487
    %v1489 = vmul.f32 %v1484, %v1488
    %v1490 = vmul.f32 %v718, %v1489
    %vm1491 = vcmp.eq.f32.partialorder %v718, inf
    %v1492 = vsel %vm1491, %v718, %v1490
    %vm1493 = vcmp.eq.f32.partialorder %v718, 0.0
    %v1494 = vand.u32 %v718, 2147483648
    %v1495 = vsel %vm1493, %v1494, %v1492
    %v1496 = vrsqrt.pop %v719
    %v1497 = vmul.f32 %v1496, %v719
    %v1498 = vmul.f32 %v1497, %v1496
    %v1499 = vmul.f32 0.5, %v1498
    %v1500 = vsub.f32 1.5, %v1499
    %v1501 = vmul.f32 %v1496, %v1500
    %v1502 = vmul.f32 %v719, %v1501
    %vm1503 = vcmp.eq.f32.partialorder %v719, inf
    %v1504 = vsel %vm1503, %v719, %v1502
    %vm1505 = vcmp.eq.f32.partialorder %v719, 0.0
    %v1506 = vand.u32 %v719, 2147483648
    %v1507 = vsel %vm1505, %v1506, %v1504
    %v1508 = vrsqrt.pop %v720
    %v1509 = vmul.f32 %v1508, %v720
    %v1510 = vmul.f32 %v1509, %v1508
    %v1511 = vmul.f32 0.5, %v1510
    %v1512 = vsub.f32 1.5, %v1511
    %v1513 = vmul.f32 %v1508, %v1512
    %v1514 = vmul.f32 %v720, %v1513
    %vm1515 = vcmp.eq.f32.partialorder %v720, inf
    %v1516 = vsel %vm1515, %v720, %v1514
    %vm1517 = vcmp.eq.f32.partialorder %v720, 0.0
    %v1518 = vand.u32 %v720, 2147483648
    %v1519 = vsel %vm1517, %v1518, %v1516
    %v1520 = vrsqrt.pop %v721
    %v1521 = vmul.f32 %v1520, %v721
    %v1522 = vmul.f32 %v1521, %v1520
    %v1523 = vmul.f32 0.5, %v1522
    %v1524 = vsub.f32 1.5, %v1523
    %v1525 = vmul.f32 %v1520, %v1524
    %v1526 = vmul.f32 %v721, %v1525
    %vm1527 = vcmp.eq.f32.partialorder %v721, inf
    %v1528 = vsel %vm1527, %v721, %v1526
    %vm1529 = vcmp.eq.f32.partialorder %v721, 0.0
    %v1530 = vand.u32 %v721, 2147483648
    %v1531 = vsel %vm1529, %v1530, %v1528
    %v1532 = vrsqrt.pop %v722
    %v1533 = vmul.f32 %v1532, %v722
    %v1534 = vmul.f32 %v1533, %v1532
    %v1535 = vmul.f32 0.5, %v1534
    %v1536 = vsub.f32 1.5, %v1535
    %v1537 = vmul.f32 %v1532, %v1536
    %v1538 = vmul.f32 %v722, %v1537
    %vm1539 = vcmp.eq.f32.partialorder %v722, inf
    %v1540 = vsel %vm1539, %v722, %v1538
    %vm1541 = vcmp.eq.f32.partialorder %v722, 0.0
    %v1542 = vand.u32 %v722, 2147483648
    %v1543 = vsel %vm1541, %v1542, %v1540
    %v1544 = vrsqrt.pop %v723
    %v1545 = vmul.f32 %v1544, %v723
    %v1546 = vmul.f32 %v1545, %v1544
    %v1547 = vmul.f32 0.5, %v1546
    %v1548 = vsub.f32 1.5, %v1547
    %v1549 = vmul.f32 %v1544, %v1548
    %v1550 = vmul.f32 %v723, %v1549
    %vm1551 = vcmp.eq.f32.partialorder %v723, inf
    %v1552 = vsel %vm1551, %v723, %v1550
    %vm1553 = vcmp.eq.f32.partialorder %v723, 0.0
    %v1554 = vand.u32 %v723, 2147483648
    %v1555 = vsel %vm1553, %v1554, %v1552
    %v1556 = vrsqrt.pop %v724
    %v1557 = vmul.f32 %v1556, %v724
    %v1558 = vmul.f32 %v1557, %v1556
    %v1559 = vmul.f32 0.5, %v1558
    %v1560 = vsub.f32 1.5, %v1559
    %v1561 = vmul.f32 %v1556, %v1560
    %v1562 = vmul.f32 %v724, %v1561
    %vm1563 = vcmp.eq.f32.partialorder %v724, inf
    %v1564 = vsel %vm1563, %v724, %v1562
    %vm1565 = vcmp.eq.f32.partialorder %v724, 0.0
    %v1566 = vand.u32 %v724, 2147483648
    %v1567 = vsel %vm1565, %v1566, %v1564
    %v1568 = vrsqrt.pop %v725
    %v1569 = vmul.f32 %v1568, %v725
    %v1570 = vmul.f32 %v1569, %v1568
    %v1571 = vmul.f32 0.5, %v1570
    %v1572 = vsub.f32 1.5, %v1571
    %v1573 = vmul.f32 %v1568, %v1572
    %v1574 = vmul.f32 %v725, %v1573
    %vm1575 = vcmp.eq.f32.partialorder %v725, inf
    %v1576 = vsel %vm1575, %v725, %v1574
    %vm1577 = vcmp.eq.f32.partialorder %v725, 0.0
    %v1578 = vand.u32 %v725, 2147483648
    %v1579 = vsel %vm1577, %v1578, %v1576
    %v1580 = vrsqrt.pop %v726
    %v1581 = vmul.f32 %v1580, %v726
    %v1582 = vmul.f32 %v1581, %v1580
    %v1583 = vmul.f32 0.5, %v1582
    %v1584 = vsub.f32 1.5, %v1583
    %v1585 = vmul.f32 %v1580, %v1584
    %v1586 = vmul.f32 %v726, %v1585
    %vm1587 = vcmp.eq.f32.partialorder %v726, inf
    %v1588 = vsel %vm1587, %v726, %v1586
    %vm1589 = vcmp.eq.f32.partialorder %v726, 0.0
    %v1590 = vand.u32 %v726, 2147483648
    %v1591 = vsel %vm1589, %v1590, %v1588
    %v1592 = vrsqrt.pop %v727
    %v1593 = vmul.f32 %v1592, %v727
    %v1594 = vmul.f32 %v1593, %v1592
    %v1595 = vmul.f32 0.5, %v1594
    %v1596 = vsub.f32 1.5, %v1595
    %v1597 = vmul.f32 %v1592, %v1596
    %v1598 = vmul.f32 %v727, %v1597
    %vm1599 = vcmp.eq.f32.partialorder %v727, inf
    %v1600 = vsel %vm1599, %v727, %v1598
    %vm1601 = vcmp.eq.f32.partialorder %v727, 0.0
    %v1602 = vand.u32 %v727, 2147483648
    %v1603 = vsel %vm1601, %v1602, %v1600
    %v1604 = vrsqrt.pop %v728
    %v1605 = vmul.f32 %v1604, %v728
    %v1606 = vmul.f32 %v1605, %v1604
    %v1607 = vmul.f32 0.5, %v1606
    %v1608 = vsub.f32 1.5, %v1607
    %v1609 = vmul.f32 %v1604, %v1608
    %v1610 = vmul.f32 %v728, %v1609
    %vm1611 = vcmp.eq.f32.partialorder %v728, inf
    %v1612 = vsel %vm1611, %v728, %v1610
    %vm1613 = vcmp.eq.f32.partialorder %v728, 0.0
    %v1614 = vand.u32 %v728, 2147483648
    %v1615 = vsel %vm1613, %v1614, %v1612
    %v1616 = vrsqrt.pop %v729
    %v1617 = vmul.f32 %v1616, %v729
    %v1618 = vmul.f32 %v1617, %v1616
    %v1619 = vmul.f32 0.5, %v1618
    %v1620 = vsub.f32 1.5, %v1619
    %v1621 = vmul.f32 %v1616, %v1620
    %v1622 = vmul.f32 %v729, %v1621
    %vm1623 = vcmp.eq.f32.partialorder %v729, inf
    %v1624 = vsel %vm1623, %v729, %v1622
    %vm1625 = vcmp.eq.f32.partialorder %v729, 0.0
    %v1626 = vand.u32 %v729, 2147483648
    %v1627 = vsel %vm1625, %v1626, %v1624
    %v1628 = vrsqrt.pop %v730
    %v1629 = vmul.f32 %v1628, %v730
    %v1630 = vmul.f32 %v1629, %v1628
    %v1631 = vmul.f32 0.5, %v1630
    %v1632 = vsub.f32 1.5, %v1631
    %v1633 = vmul.f32 %v1628, %v1632
    %v1634 = vmul.f32 %v730, %v1633
    %vm1635 = vcmp.eq.f32.partialorder %v730, inf
    %v1636 = vsel %vm1635, %v730, %v1634
    %vm1637 = vcmp.eq.f32.partialorder %v730, 0.0
    %v1638 = vand.u32 %v730, 2147483648
    %v1639 = vsel %vm1637, %v1638, %v1636
    %v1640 = vrsqrt.pop %v731
    %v1641 = vmul.f32 %v1640, %v731
    %v1642 = vmul.f32 %v1641, %v1640
    %v1643 = vmul.f32 0.5, %v1642
    %v1644 = vsub.f32 1.5, %v1643
    %v1645 = vmul.f32 %v1640, %v1644
    %v1646 = vmul.f32 %v731, %v1645
    %vm1647 = vcmp.eq.f32.partialorder %v731, inf
    %v1648 = vsel %vm1647, %v731, %v1646
    %vm1649 = vcmp.eq.f32.partialorder %v731, 0.0
    %v1650 = vand.u32 %v731, 2147483648
    %v1651 = vsel %vm1649, %v1650, %v1648
    %v1652 = vrsqrt.pop %v732
    %v1653 = vmul.f32 %v1652, %v732
    %v1654 = vmul.f32 %v1653, %v1652
    %v1655 = vmul.f32 0.5, %v1654
    %v1656 = vsub.f32 1.5, %v1655
    %v1657 = vmul.f32 %v1652, %v1656
    %v1658 = vmul.f32 %v732, %v1657
    %vm1659 = vcmp.eq.f32.partialorder %v732, inf
    %v1660 = vsel %vm1659, %v732, %v1658
    %vm1661 = vcmp.eq.f32.partialorder %v732, 0.0
    %v1662 = vand.u32 %v732, 2147483648
    %v1663 = vsel %vm1661, %v1662, %v1660
    %v1664 = vrsqrt.pop %v733
    %v1665 = vmul.f32 %v1664, %v733
    %v1666 = vmul.f32 %v1665, %v1664
    %v1667 = vmul.f32 0.5, %v1666
    %v1668 = vsub.f32 1.5, %v1667
    %v1669 = vmul.f32 %v1664, %v1668
    %v1670 = vmul.f32 %v733, %v1669
    %vm1671 = vcmp.eq.f32.partialorder %v733, inf
    %v1672 = vsel %vm1671, %v733, %v1670
    %vm1673 = vcmp.eq.f32.partialorder %v733, 0.0
    %v1674 = vand.u32 %v733, 2147483648
    %v1675 = vsel %vm1673, %v1674, %v1672
    %v1676 = vrsqrt.pop %v734
    %v1677 = vmul.f32 %v1676, %v734
    %v1678 = vmul.f32 %v1677, %v1676
    %v1679 = vmul.f32 0.5, %v1678
    %v1680 = vsub.f32 1.5, %v1679
    %v1681 = vmul.f32 %v1676, %v1680
    %v1682 = vmul.f32 %v734, %v1681
    %vm1683 = vcmp.eq.f32.partialorder %v734, inf
    %v1684 = vsel %vm1683, %v734, %v1682
    %vm1685 = vcmp.eq.f32.partialorder %v734, 0.0
    %v1686 = vand.u32 %v734, 2147483648
    %v1687 = vsel %vm1685, %v1686, %v1684
    %v1688 = vrsqrt.pop %v735
    %v1689 = vmul.f32 %v1688, %v735
    %v1690 = vmul.f32 %v1689, %v1688
    %v1691 = vmul.f32 0.5, %v1690
    %v1692 = vsub.f32 1.5, %v1691
    %v1693 = vmul.f32 %v1688, %v1692
    %v1694 = vmul.f32 %v735, %v1693
    %vm1695 = vcmp.eq.f32.partialorder %v735, inf
    %v1696 = vsel %vm1695, %v735, %v1694
    %vm1697 = vcmp.eq.f32.partialorder %v735, 0.0
    %v1698 = vand.u32 %v735, 2147483648
    %v1699 = vsel %vm1697, %v1698, %v1696
    %v1700 = vrsqrt.pop %v736
    %v1701 = vmul.f32 %v1700, %v736
    %v1702 = vmul.f32 %v1701, %v1700
    %v1703 = vmul.f32 0.5, %v1702
    %v1704 = vsub.f32 1.5, %v1703
    %v1705 = vmul.f32 %v1700, %v1704
    %v1706 = vmul.f32 %v736, %v1705
    %vm1707 = vcmp.eq.f32.partialorder %v736, inf
    %v1708 = vsel %vm1707, %v736, %v1706
    %vm1709 = vcmp.eq.f32.partialorder %v736, 0.0
    %v1710 = vand.u32 %v736, 2147483648
    %v1711 = vsel %vm1709, %v1710, %v1708
    %v1712 = vrsqrt.pop %v737
    %v1713 = vmul.f32 %v1712, %v737
    %v1714 = vmul.f32 %v1713, %v1712
    %v1715 = vmul.f32 0.5, %v1714
    %v1716 = vsub.f32 1.5, %v1715
    %v1717 = vmul.f32 %v1712, %v1716
    %v1718 = vmul.f32 %v737, %v1717
    %vm1719 = vcmp.eq.f32.partialorder %v737, inf
    %v1720 = vsel %vm1719, %v737, %v1718
    %vm1721 = vcmp.eq.f32.partialorder %v737, 0.0
    %v1722 = vand.u32 %v737, 2147483648
    %v1723 = vsel %vm1721, %v1722, %v1720
    %v1724 = vrsqrt.pop %v738
    %v1725 = vmul.f32 %v1724, %v738
    %v1726 = vmul.f32 %v1725, %v1724
    %v1727 = vmul.f32 0.5, %v1726
    %v1728 = vsub.f32 1.5, %v1727
    %v1729 = vmul.f32 %v1724, %v1728
    %v1730 = vmul.f32 %v738, %v1729
    %vm1731 = vcmp.eq.f32.partialorder %v738, inf
    %v1732 = vsel %vm1731, %v738, %v1730
    %vm1733 = vcmp.eq.f32.partialorder %v738, 0.0
    %v1734 = vand.u32 %v738, 2147483648
    %v1735 = vsel %vm1733, %v1734, %v1732
    %v1736 = vrsqrt.pop %v739
    %v1737 = vmul.f32 %v1736, %v739
    %v1738 = vmul.f32 %v1737, %v1736
    %v1739 = vmul.f32 0.5, %v1738
    %v1740 = vsub.f32 1.5, %v1739
    %v1741 = vmul.f32 %v1736, %v1740
    %v1742 = vmul.f32 %v739, %v1741
    %vm1743 = vcmp.eq.f32.partialorder %v739, inf
    %v1744 = vsel %vm1743, %v739, %v1742
    %vm1745 = vcmp.eq.f32.partialorder %v739, 0.0
    %v1746 = vand.u32 %v739, 2147483648
    %v1747 = vsel %vm1745, %v1746, %v1744
    %v1748 = vrsqrt.pop %v740
    %v1749 = vmul.f32 %v1748, %v740
    %v1750 = vmul.f32 %v1749, %v1748
    %v1751 = vmul.f32 0.5, %v1750
    %v1752 = vsub.f32 1.5, %v1751
    %v1753 = vmul.f32 %v1748, %v1752
    %v1754 = vmul.f32 %v740, %v1753
    %vm1755 = vcmp.eq.f32.partialorder %v740, inf
    %v1756 = vsel %vm1755, %v740, %v1754
    %vm1757 = vcmp.eq.f32.partialorder %v740, 0.0
    %v1758 = vand.u32 %v740, 2147483648
    %v1759 = vsel %vm1757, %v1758, %v1756
    %v1760 = vrsqrt.pop %v741
    %v1761 = vmul.f32 %v1760, %v741
    %v1762 = vmul.f32 %v1761, %v1760
    %v1763 = vmul.f32 0.5, %v1762
    %v1764 = vsub.f32 1.5, %v1763
    %v1765 = vmul.f32 %v1760, %v1764
    %v1766 = vmul.f32 %v741, %v1765
    %vm1767 = vcmp.eq.f32.partialorder %v741, inf
    %v1768 = vsel %vm1767, %v741, %v1766
    %vm1769 = vcmp.eq.f32.partialorder %v741, 0.0
    %v1770 = vand.u32 %v741, 2147483648
    %v1771 = vsel %vm1769, %v1770, %v1768
    %v1772 = vrsqrt.pop %v742
    %v1773 = vmul.f32 %v1772, %v742
    %v1774 = vmul.f32 %v1773, %v1772
    %v1775 = vmul.f32 0.5, %v1774
    %v1776 = vsub.f32 1.5, %v1775
    %v1777 = vmul.f32 %v1772, %v1776
    %v1778 = vmul.f32 %v742, %v1777
    %vm1779 = vcmp.eq.f32.partialorder %v742, inf
    %v1780 = vsel %vm1779, %v742, %v1778
    %vm1781 = vcmp.eq.f32.partialorder %v742, 0.0
    %v1782 = vand.u32 %v742, 2147483648
    %v1783 = vsel %vm1781, %v1782, %v1780
    %v1784 = vrsqrt.pop %v743
    %v1785 = vmul.f32 %v1784, %v743
    %v1786 = vmul.f32 %v1785, %v1784
    %v1787 = vmul.f32 0.5, %v1786
    %v1788 = vsub.f32 1.5, %v1787
    %v1789 = vmul.f32 %v1784, %v1788
    %v1790 = vmul.f32 %v743, %v1789
    %vm1791 = vcmp.eq.f32.partialorder %v743, inf
    %v1792 = vsel %vm1791, %v743, %v1790
    %vm1793 = vcmp.eq.f32.partialorder %v743, 0.0
    %v1794 = vand.u32 %v743, 2147483648
    %v1795 = vsel %vm1793, %v1794, %v1792
    %v1796 = vrsqrt.pop %v744
    %v1797 = vmul.f32 %v1796, %v744
    %v1798 = vmul.f32 %v1797, %v1796
    %v1799 = vmul.f32 0.5, %v1798
    %v1800 = vsub.f32 1.5, %v1799
    %v1801 = vmul.f32 %v1796, %v1800
    %v1802 = vmul.f32 %v744, %v1801
    %vm1803 = vcmp.eq.f32.partialorder %v744, inf
    %v1804 = vsel %vm1803, %v744, %v1802
    %vm1805 = vcmp.eq.f32.partialorder %v744, 0.0
    %v1806 = vand.u32 %v744, 2147483648
    %v1807 = vsel %vm1805, %v1806, %v1804
    %v1808 = vrsqrt.pop %v745
    %v1809 = vmul.f32 %v1808, %v745
    %v1810 = vmul.f32 %v1809, %v1808
    %v1811 = vmul.f32 0.5, %v1810
    %v1812 = vsub.f32 1.5, %v1811
    %v1813 = vmul.f32 %v1808, %v1812
    %v1814 = vmul.f32 %v745, %v1813
    %vm1815 = vcmp.eq.f32.partialorder %v745, inf
    %v1816 = vsel %vm1815, %v745, %v1814
    %vm1817 = vcmp.eq.f32.partialorder %v745, 0.0
    %v1818 = vand.u32 %v745, 2147483648
    %v1819 = vsel %vm1817, %v1818, %v1816
    %v1820 = vrsqrt.pop %v746
    %v1821 = vmul.f32 %v1820, %v746
    %v1822 = vmul.f32 %v1821, %v1820
    %v1823 = vmul.f32 0.5, %v1822
    %v1824 = vsub.f32 1.5, %v1823
    %v1825 = vmul.f32 %v1820, %v1824
    %v1826 = vmul.f32 %v746, %v1825
    %vm1827 = vcmp.eq.f32.partialorder %v746, inf
    %v1828 = vsel %vm1827, %v746, %v1826
    %vm1829 = vcmp.eq.f32.partialorder %v746, 0.0
    %v1830 = vand.u32 %v746, 2147483648
    %v1831 = vsel %vm1829, %v1830, %v1828
    %v1832 = vrsqrt.pop %v747
    %v1833 = vmul.f32 %v1832, %v747
    %v1834 = vmul.f32 %v1833, %v1832
    %v1835 = vmul.f32 0.5, %v1834
    %v1836 = vsub.f32 1.5, %v1835
    %v1837 = vmul.f32 %v1832, %v1836
    %v1838 = vmul.f32 %v747, %v1837
    %vm1839 = vcmp.eq.f32.partialorder %v747, inf
    %v1840 = vsel %vm1839, %v747, %v1838
    %vm1841 = vcmp.eq.f32.partialorder %v747, 0.0
    %v1842 = vand.u32 %v747, 2147483648
    %v1843 = vsel %vm1841, %v1842, %v1840
    %v1844 = vrsqrt.pop %v748
    %v1845 = vmul.f32 %v1844, %v748
    %v1846 = vmul.f32 %v1845, %v1844
    %v1847 = vmul.f32 0.5, %v1846
    %v1848 = vsub.f32 1.5, %v1847
    %v1849 = vmul.f32 %v1844, %v1848
    %v1850 = vmul.f32 %v748, %v1849
    %vm1851 = vcmp.eq.f32.partialorder %v748, inf
    %v1852 = vsel %vm1851, %v748, %v1850
    %vm1853 = vcmp.eq.f32.partialorder %v748, 0.0
    %v1854 = vand.u32 %v748, 2147483648
    %v1855 = vsel %vm1853, %v1854, %v1852
    %v1856 = vrsqrt.pop %v749
    %v1857 = vmul.f32 %v1856, %v749
    %v1858 = vmul.f32 %v1857, %v1856
    %v1859 = vmul.f32 0.5, %v1858
    %v1860 = vsub.f32 1.5, %v1859
    %v1861 = vmul.f32 %v1856, %v1860
    %v1862 = vmul.f32 %v749, %v1861
    %vm1863 = vcmp.eq.f32.partialorder %v749, inf
    %v1864 = vsel %vm1863, %v749, %v1862
    %vm1865 = vcmp.eq.f32.partialorder %v749, 0.0
    %v1866 = vand.u32 %v749, 2147483648
    %v1867 = vsel %vm1865, %v1866, %v1864
    %v1868 = vrsqrt.pop %v750
    %v1869 = vmul.f32 %v1868, %v750
    %v1870 = vmul.f32 %v1869, %v1868
    %v1871 = vmul.f32 0.5, %v1870
    %v1872 = vsub.f32 1.5, %v1871
    %v1873 = vmul.f32 %v1868, %v1872
    %v1874 = vmul.f32 %v750, %v1873
    %vm1875 = vcmp.eq.f32.partialorder %v750, inf
    %v1876 = vsel %vm1875, %v750, %v1874
    %vm1877 = vcmp.eq.f32.partialorder %v750, 0.0
    %v1878 = vand.u32 %v750, 2147483648
    %v1879 = vsel %vm1877, %v1878, %v1876
    %v1880 = vrsqrt.pop %v751
    %v1881 = vmul.f32 %v1880, %v751
    %v1882 = vmul.f32 %v1881, %v1880
    %v1883 = vmul.f32 0.5, %v1882
    %v1884 = vsub.f32 1.5, %v1883
    %v1885 = vmul.f32 %v1880, %v1884
    %v1886 = vmul.f32 %v751, %v1885
    %vm1887 = vcmp.eq.f32.partialorder %v751, inf
    %v1888 = vsel %vm1887, %v751, %v1886
    %vm1889 = vcmp.eq.f32.partialorder %v751, 0.0
    %v1890 = vand.u32 %v751, 2147483648
    %v1891 = vsel %vm1889, %v1890, %v1888
    %v1892 = vrsqrt.pop %v752
    %v1893 = vmul.f32 %v1892, %v752
    %v1894 = vmul.f32 %v1893, %v1892
    %v1895 = vmul.f32 0.5, %v1894
    %v1896 = vsub.f32 1.5, %v1895
    %v1897 = vmul.f32 %v1892, %v1896
    %v1898 = vmul.f32 %v752, %v1897
    %vm1899 = vcmp.eq.f32.partialorder %v752, inf
    %v1900 = vsel %vm1899, %v752, %v1898
    %vm1901 = vcmp.eq.f32.partialorder %v752, 0.0
    %v1902 = vand.u32 %v752, 2147483648
    %v1903 = vsel %vm1901, %v1902, %v1900
    %v1904 = vrsqrt.pop %v753
    %v1905 = vmul.f32 %v1904, %v753
    %v1906 = vmul.f32 %v1905, %v1904
    %v1907 = vmul.f32 0.5, %v1906
    %v1908 = vsub.f32 1.5, %v1907
    %v1909 = vmul.f32 %v1904, %v1908
    %v1910 = vmul.f32 %v753, %v1909
    %vm1911 = vcmp.eq.f32.partialorder %v753, inf
    %v1912 = vsel %vm1911, %v753, %v1910
    %vm1913 = vcmp.eq.f32.partialorder %v753, 0.0
    %v1914 = vand.u32 %v753, 2147483648
    %v1915 = vsel %vm1913, %v1914, %v1912
    %v1916 = vrsqrt.pop %v754
    %v1917 = vmul.f32 %v1916, %v754
    %v1918 = vmul.f32 %v1917, %v1916
    %v1919 = vmul.f32 0.5, %v1918
    %v1920 = vsub.f32 1.5, %v1919
    %v1921 = vmul.f32 %v1916, %v1920
    %v1922 = vmul.f32 %v754, %v1921
    %vm1923 = vcmp.eq.f32.partialorder %v754, inf
    %v1924 = vsel %vm1923, %v754, %v1922
    %vm1925 = vcmp.eq.f32.partialorder %v754, 0.0
    %v1926 = vand.u32 %v754, 2147483648
    %v1927 = vsel %vm1925, %v1926, %v1924
    %v1928 = vrsqrt.pop %v755
    %v1929 = vmul.f32 %v1928, %v755
    %v1930 = vmul.f32 %v1929, %v1928
    %v1931 = vmul.f32 0.5, %v1930
    %v1932 = vsub.f32 1.5, %v1931
    %v1933 = vmul.f32 %v1928, %v1932
    %v1934 = vmul.f32 %v755, %v1933
    %vm1935 = vcmp.eq.f32.partialorder %v755, inf
    %v1936 = vsel %vm1935, %v755, %v1934
    %vm1937 = vcmp.eq.f32.partialorder %v755, 0.0
    %v1938 = vand.u32 %v755, 2147483648
    %v1939 = vsel %vm1937, %v1938, %v1936
    %v1940 = vrsqrt.pop %v756
    %v1941 = vmul.f32 %v1940, %v756
    %v1942 = vmul.f32 %v1941, %v1940
    %v1943 = vmul.f32 0.5, %v1942
    %v1944 = vsub.f32 1.5, %v1943
    %v1945 = vmul.f32 %v1940, %v1944
    %v1946 = vmul.f32 %v756, %v1945
    %vm1947 = vcmp.eq.f32.partialorder %v756, inf
    %v1948 = vsel %vm1947, %v756, %v1946
    %vm1949 = vcmp.eq.f32.partialorder %v756, 0.0
    %v1950 = vand.u32 %v756, 2147483648
    %v1951 = vsel %vm1949, %v1950, %v1948
    %v1952 = vrsqrt.pop %v757
    %v1953 = vmul.f32 %v1952, %v757
    %v1954 = vmul.f32 %v1953, %v1952
    %v1955 = vmul.f32 0.5, %v1954
    %v1956 = vsub.f32 1.5, %v1955
    %v1957 = vmul.f32 %v1952, %v1956
    %v1958 = vmul.f32 %v757, %v1957
    %vm1959 = vcmp.eq.f32.partialorder %v757, inf
    %v1960 = vsel %vm1959, %v757, %v1958
    %vm1961 = vcmp.eq.f32.partialorder %v757, 0.0
    %v1962 = vand.u32 %v757, 2147483648
    %v1963 = vsel %vm1961, %v1962, %v1960
    %v1964 = vrsqrt.pop %v758
    %v1965 = vmul.f32 %v1964, %v758
    %v1966 = vmul.f32 %v1965, %v1964
    %v1967 = vmul.f32 0.5, %v1966
    %v1968 = vsub.f32 1.5, %v1967
    %v1969 = vmul.f32 %v1964, %v1968
    %v1970 = vmul.f32 %v758, %v1969
    %vm1971 = vcmp.eq.f32.partialorder %v758, inf
    %v1972 = vsel %vm1971, %v758, %v1970
    %vm1973 = vcmp.eq.f32.partialorder %v758, 0.0
    %v1974 = vand.u32 %v758, 2147483648
    %v1975 = vsel %vm1973, %v1974, %v1972
    %v1976 = vrsqrt.pop %v759
    %v1977 = vmul.f32 %v1976, %v759
    %v1978 = vmul.f32 %v1977, %v1976
    %v1979 = vmul.f32 0.5, %v1978
    %v1980 = vsub.f32 1.5, %v1979
    %v1981 = vmul.f32 %v1976, %v1980
    %v1982 = vmul.f32 %v759, %v1981
    %vm1983 = vcmp.eq.f32.partialorder %v759, inf
    %v1984 = vsel %vm1983, %v759, %v1982
    %vm1985 = vcmp.eq.f32.partialorder %v759, 0.0
    %v1986 = vand.u32 %v759, 2147483648
    %v1987 = vsel %vm1985, %v1986, %v1984
    %v1988 = vrsqrt.pop %v760
    %v1989 = vmul.f32 %v1988, %v760
    %v1990 = vmul.f32 %v1989, %v1988
    %v1991 = vmul.f32 0.5, %v1990
    %v1992 = vsub.f32 1.5, %v1991
    %v1993 = vmul.f32 %v1988, %v1992
    %v1994 = vmul.f32 %v760, %v1993
    %vm1995 = vcmp.eq.f32.partialorder %v760, inf
    %v1996 = vsel %vm1995, %v760, %v1994
    %vm1997 = vcmp.eq.f32.partialorder %v760, 0.0
    %v1998 = vand.u32 %v760, 2147483648
    %v1999 = vsel %vm1997, %v1998, %v1996
    %v2000 = vrsqrt.pop %v761
    %v2001 = vmul.f32 %v2000, %v761
    %v2002 = vmul.f32 %v2001, %v2000
    %v2003 = vmul.f32 0.5, %v2002
    %v2004 = vsub.f32 1.5, %v2003
    %v2005 = vmul.f32 %v2000, %v2004
    %v2006 = vmul.f32 %v761, %v2005
    %vm2007 = vcmp.eq.f32.partialorder %v761, inf
    %v2008 = vsel %vm2007, %v761, %v2006
    %vm2009 = vcmp.eq.f32.partialorder %v761, 0.0
    %v2010 = vand.u32 %v761, 2147483648
    %v2011 = vsel %vm2009, %v2010, %v2008
    %v2012 = vrsqrt.pop %v762
    %v2013 = vmul.f32 %v2012, %v762
    %v2014 = vmul.f32 %v2013, %v2012
    %v2015 = vmul.f32 0.5, %v2014
    %v2016 = vsub.f32 1.5, %v2015
    %v2017 = vmul.f32 %v2012, %v2016
    %v2018 = vmul.f32 %v762, %v2017
    %vm2019 = vcmp.eq.f32.partialorder %v762, inf
    %v2020 = vsel %vm2019, %v762, %v2018
    %vm2021 = vcmp.eq.f32.partialorder %v762, 0.0
    %v2022 = vand.u32 %v762, 2147483648
    %v2023 = vsel %vm2021, %v2022, %v2020
    %v2024 = vrsqrt.pop %v763
    %v2025 = vmul.f32 %v2024, %v763
    %v2026 = vmul.f32 %v2025, %v2024
    %v2027 = vmul.f32 0.5, %v2026
    %v2028 = vsub.f32 1.5, %v2027
    %v2029 = vmul.f32 %v2024, %v2028
    %v2030 = vmul.f32 %v763, %v2029
    %vm2031 = vcmp.eq.f32.partialorder %v763, inf
    %v2032 = vsel %vm2031, %v763, %v2030
    %vm2033 = vcmp.eq.f32.partialorder %v763, 0.0
    %v2034 = vand.u32 %v763, 2147483648
    %v2035 = vsel %vm2033, %v2034, %v2032
    %v2036 = vrsqrt.pop %v764
    %v2037 = vmul.f32 %v2036, %v764
    %v2038 = vmul.f32 %v2037, %v2036
    %v2039 = vmul.f32 0.5, %v2038
    %v2040 = vsub.f32 1.5, %v2039
    %v2041 = vmul.f32 %v2036, %v2040
    %v2042 = vmul.f32 %v764, %v2041
    %vm2043 = vcmp.eq.f32.partialorder %v764, inf
    %v2044 = vsel %vm2043, %v764, %v2042
    %vm2045 = vcmp.eq.f32.partialorder %v764, 0.0
    %v2046 = vand.u32 %v764, 2147483648
    %v2047 = vsel %vm2045, %v2046, %v2044
    %v2048 = vrsqrt.pop %v765
    %v2049 = vmul.f32 %v2048, %v765
    %v2050 = vmul.f32 %v2049, %v2048
    %v2051 = vmul.f32 0.5, %v2050
    %v2052 = vsub.f32 1.5, %v2051
    %v2053 = vmul.f32 %v2048, %v2052
    %v2054 = vmul.f32 %v765, %v2053
    %vm2055 = vcmp.eq.f32.partialorder %v765, inf
    %v2056 = vsel %vm2055, %v765, %v2054
    %vm2057 = vcmp.eq.f32.partialorder %v765, 0.0
    %v2058 = vand.u32 %v765, 2147483648
    %v2059 = vsel %vm2057, %v2058, %v2056
    %v2060 = vrsqrt.pop %v766
    %v2061 = vmul.f32 %v2060, %v766
    %v2062 = vmul.f32 %v2061, %v2060
    %v2063 = vmul.f32 0.5, %v2062
    %v2064 = vsub.f32 1.5, %v2063
    %v2065 = vmul.f32 %v2060, %v2064
    %v2066 = vmul.f32 %v766, %v2065
    %vm2067 = vcmp.eq.f32.partialorder %v766, inf
    %v2068 = vsel %vm2067, %v766, %v2066
    %vm2069 = vcmp.eq.f32.partialorder %v766, 0.0
    %v2070 = vand.u32 %v766, 2147483648
    %v2071 = vsel %vm2069, %v2070, %v2068
    %v2072 = vrsqrt.pop %v767
    %v2073 = vmul.f32 %v2072, %v767
    %v2074 = vmul.f32 %v2073, %v2072
    %v2075 = vmul.f32 0.5, %v2074
    %v2076 = vsub.f32 1.5, %v2075
    %v2077 = vmul.f32 %v2072, %v2076
    %v2078 = vmul.f32 %v767, %v2077
    %vm2079 = vcmp.eq.f32.partialorder %v767, inf
    %v2080 = vsel %vm2079, %v767, %v2078
    %vm2081 = vcmp.eq.f32.partialorder %v767, 0.0
    %v2082 = vand.u32 %v767, 2147483648
    %v2083 = vsel %vm2081, %v2082, %v2080
    %v2084 = vrsqrt.pop %v768
    %v2085 = vmul.f32 %v2084, %v768
    %v2086 = vmul.f32 %v2085, %v2084
    %v2087 = vmul.f32 0.5, %v2086
    %v2088 = vsub.f32 1.5, %v2087
    %v2089 = vmul.f32 %v2084, %v2088
    %v2090 = vmul.f32 %v768, %v2089
    %vm2091 = vcmp.eq.f32.partialorder %v768, inf
    %v2092 = vsel %vm2091, %v768, %v2090
    %vm2093 = vcmp.eq.f32.partialorder %v768, 0.0
    %v2094 = vand.u32 %v768, 2147483648
    %v2095 = vsel %vm2093, %v2094, %v2092
    %v2096 = vrsqrt.pop %v769
    %v2097 = vmul.f32 %v2096, %v769
    %v2098 = vmul.f32 %v2097, %v2096
    %v2099 = vmul.f32 0.5, %v2098
    %v2100 = vsub.f32 1.5, %v2099
    %v2101 = vmul.f32 %v2096, %v2100
    %v2102 = vmul.f32 %v769, %v2101
    %vm2103 = vcmp.eq.f32.partialorder %v769, inf
    %v2104 = vsel %vm2103, %v769, %v2102
    %vm2105 = vcmp.eq.f32.partialorder %v769, 0.0
    %v2106 = vand.u32 %v769, 2147483648
    %v2107 = vsel %vm2105, %v2106, %v2104
    %v2108 = vrsqrt.pop %v770
    %v2109 = vmul.f32 %v2108, %v770
    %v2110 = vmul.f32 %v2109, %v2108
    %v2111 = vmul.f32 0.5, %v2110
    %v2112 = vsub.f32 1.5, %v2111
    %v2113 = vmul.f32 %v2108, %v2112
    %v2114 = vmul.f32 %v770, %v2113
    %vm2115 = vcmp.eq.f32.partialorder %v770, inf
    %v2116 = vsel %vm2115, %v770, %v2114
    %vm2117 = vcmp.eq.f32.partialorder %v770, 0.0
    %v2118 = vand.u32 %v770, 2147483648
    %v2119 = vsel %vm2117, %v2118, %v2116
    %v2120 = vrsqrt.pop %v771
    %v2121 = vmul.f32 %v2120, %v771
    %v2122 = vmul.f32 %v2121, %v2120
    %v2123 = vmul.f32 0.5, %v2122
    %v2124 = vsub.f32 1.5, %v2123
    %v2125 = vmul.f32 %v2120, %v2124
    %v2126 = vmul.f32 %v771, %v2125
    %vm2127 = vcmp.eq.f32.partialorder %v771, inf
    %v2128 = vsel %vm2127, %v771, %v2126
    %vm2129 = vcmp.eq.f32.partialorder %v771, 0.0
    %v2130 = vand.u32 %v771, 2147483648
    %v2131 = vsel %vm2129, %v2130, %v2128
    %v2132 = vrsqrt.pop %v772
    %v2133 = vmul.f32 %v2132, %v772
    %v2134 = vmul.f32 %v2133, %v2132
    %v2135 = vmul.f32 0.5, %v2134
    %v2136 = vsub.f32 1.5, %v2135
    %v2137 = vmul.f32 %v2132, %v2136
    %v2138 = vmul.f32 %v772, %v2137
    %vm2139 = vcmp.eq.f32.partialorder %v772, inf
    %v2140 = vsel %vm2139, %v772, %v2138
    %vm2141 = vcmp.eq.f32.partialorder %v772, 0.0
    %v2142 = vand.u32 %v772, 2147483648
    %v2143 = vsel %vm2141, %v2142, %v2140
    %v2144 = vrsqrt.pop %v773
    %v2145 = vmul.f32 %v2144, %v773
    %v2146 = vmul.f32 %v2145, %v2144
    %v2147 = vmul.f32 0.5, %v2146
    %v2148 = vsub.f32 1.5, %v2147
    %v2149 = vmul.f32 %v2144, %v2148
    %v2150 = vmul.f32 %v773, %v2149
    %vm2151 = vcmp.eq.f32.partialorder %v773, inf
    %v2152 = vsel %vm2151, %v773, %v2150
    %vm2153 = vcmp.eq.f32.partialorder %v773, 0.0
    %v2154 = vand.u32 %v773, 2147483648
    %v2155 = vsel %vm2153, %v2154, %v2152
    %v2156 = vrsqrt.pop %v774
    %v2157 = vmul.f32 %v2156, %v774
    %v2158 = vmul.f32 %v2157, %v2156
    %v2159 = vmul.f32 0.5, %v2158
    %v2160 = vsub.f32 1.5, %v2159
    %v2161 = vmul.f32 %v2156, %v2160
    %v2162 = vmul.f32 %v774, %v2161
    %vm2163 = vcmp.eq.f32.partialorder %v774, inf
    %v2164 = vsel %vm2163, %v774, %v2162
    %vm2165 = vcmp.eq.f32.partialorder %v774, 0.0
    %v2166 = vand.u32 %v774, 2147483648
    %v2167 = vsel %vm2165, %v2166, %v2164
    %v2168 = vrsqrt.pop %v775
    %v2169 = vmul.f32 %v2168, %v775
    %v2170 = vmul.f32 %v2169, %v2168
    %v2171 = vmul.f32 0.5, %v2170
    %v2172 = vsub.f32 1.5, %v2171
    %v2173 = vmul.f32 %v2168, %v2172
    %v2174 = vmul.f32 %v775, %v2173
    %vm2175 = vcmp.eq.f32.partialorder %v775, inf
    %v2176 = vsel %vm2175, %v775, %v2174
    %vm2177 = vcmp.eq.f32.partialorder %v775, 0.0
    %v2178 = vand.u32 %v775, 2147483648
    %v2179 = vsel %vm2177, %v2178, %v2176
    %v2180 = vrsqrt.pop %v776
    %v2181 = vmul.f32 %v2180, %v776
    %v2182 = vmul.f32 %v2181, %v2180
    %v2183 = vmul.f32 0.5, %v2182
    %v2184 = vsub.f32 1.5, %v2183
    %v2185 = vmul.f32 %v2180, %v2184
    %v2186 = vmul.f32 %v776, %v2185
    %vm2187 = vcmp.eq.f32.partialorder %v776, inf
    %v2188 = vsel %vm2187, %v776, %v2186
    %vm2189 = vcmp.eq.f32.partialorder %v776, 0.0
    %v2190 = vand.u32 %v776, 2147483648
    %v2191 = vsel %vm2189, %v2190, %v2188
    %v2192 = vrsqrt.pop %v777
    %v2193 = vmul.f32 %v2192, %v777
    %v2194 = vmul.f32 %v2193, %v2192
    %v2195 = vmul.f32 0.5, %v2194
    %v2196 = vsub.f32 1.5, %v2195
    %v2197 = vmul.f32 %v2192, %v2196
    %v2198 = vmul.f32 %v777, %v2197
    %vm2199 = vcmp.eq.f32.partialorder %v777, inf
    %v2200 = vsel %vm2199, %v777, %v2198
    %vm2201 = vcmp.eq.f32.partialorder %v777, 0.0
    %v2202 = vand.u32 %v777, 2147483648
    %v2203 = vsel %vm2201, %v2202, %v2200
    %v2204 = vrsqrt.pop %v778
    %v2205 = vmul.f32 %v2204, %v778
    %v2206 = vmul.f32 %v2205, %v2204
    %v2207 = vmul.f32 0.5, %v2206
    %v2208 = vsub.f32 1.5, %v2207
    %v2209 = vmul.f32 %v2204, %v2208
    %v2210 = vmul.f32 %v778, %v2209
    %vm2211 = vcmp.eq.f32.partialorder %v778, inf
    %v2212 = vsel %vm2211, %v778, %v2210
    %vm2213 = vcmp.eq.f32.partialorder %v778, 0.0
    %v2214 = vand.u32 %v778, 2147483648
    %v2215 = vsel %vm2213, %v2214, %v2212
    %v2216 = vrsqrt.pop %v779
    %v2217 = vmul.f32 %v2216, %v779
    %v2218 = vmul.f32 %v2217, %v2216
    %v2219 = vmul.f32 0.5, %v2218
    %v2220 = vsub.f32 1.5, %v2219
    %v2221 = vmul.f32 %v2216, %v2220
    %v2222 = vmul.f32 %v779, %v2221
    %vm2223 = vcmp.eq.f32.partialorder %v779, inf
    %v2224 = vsel %vm2223, %v779, %v2222
    %vm2225 = vcmp.eq.f32.partialorder %v779, 0.0
    %v2226 = vand.u32 %v779, 2147483648
    %v2227 = vsel %vm2225, %v2226, %v2224
    %v2228 = vrsqrt.pop %v780
    %v2229 = vmul.f32 %v2228, %v780
    %v2230 = vmul.f32 %v2229, %v2228
    %v2231 = vmul.f32 0.5, %v2230
    %v2232 = vsub.f32 1.5, %v2231
    %v2233 = vmul.f32 %v2228, %v2232
    %v2234 = vmul.f32 %v780, %v2233
    %vm2235 = vcmp.eq.f32.partialorder %v780, inf
    %v2236 = vsel %vm2235, %v780, %v2234
    %vm2237 = vcmp.eq.f32.partialorder %v780, 0.0
    %v2238 = vand.u32 %v780, 2147483648
    %v2239 = vsel %vm2237, %v2238, %v2236
    %v2240 = vrsqrt.pop %v781
    %v2241 = vmul.f32 %v2240, %v781
    %v2242 = vmul.f32 %v2241, %v2240
    %v2243 = vmul.f32 0.5, %v2242
    %v2244 = vsub.f32 1.5, %v2243
    %v2245 = vmul.f32 %v2240, %v2244
    %v2246 = vmul.f32 %v781, %v2245
    %vm2247 = vcmp.eq.f32.partialorder %v781, inf
    %v2248 = vsel %vm2247, %v781, %v2246
    %vm2249 = vcmp.eq.f32.partialorder %v781, 0.0
    %v2250 = vand.u32 %v781, 2147483648
    %v2251 = vsel %vm2249, %v2250, %v2248
    %v2252 = vrsqrt.pop %v782
    %v2253 = vmul.f32 %v2252, %v782
    %v2254 = vmul.f32 %v2253, %v2252
    %v2255 = vmul.f32 0.5, %v2254
    %v2256 = vsub.f32 1.5, %v2255
    %v2257 = vmul.f32 %v2252, %v2256
    %v2258 = vmul.f32 %v782, %v2257
    %vm2259 = vcmp.eq.f32.partialorder %v782, inf
    %v2260 = vsel %vm2259, %v782, %v2258
    %vm2261 = vcmp.eq.f32.partialorder %v782, 0.0
    %v2262 = vand.u32 %v782, 2147483648
    %v2263 = vsel %vm2261, %v2262, %v2260
    %v2264 = vrsqrt.pop %v783
    %v2265 = vmul.f32 %v2264, %v783
    %v2266 = vmul.f32 %v2265, %v2264
    %v2267 = vmul.f32 0.5, %v2266
    %v2268 = vsub.f32 1.5, %v2267
    %v2269 = vmul.f32 %v2264, %v2268
    %v2270 = vmul.f32 %v783, %v2269
    %vm2271 = vcmp.eq.f32.partialorder %v783, inf
    %v2272 = vsel %vm2271, %v783, %v2270
    %vm2273 = vcmp.eq.f32.partialorder %v783, 0.0
    %v2274 = vand.u32 %v783, 2147483648
    %v2275 = vsel %vm2273, %v2274, %v2272
    %v2276 = vrsqrt.pop %v784
    %v2277 = vmul.f32 %v2276, %v784
    %v2278 = vmul.f32 %v2277, %v2276
    %v2279 = vmul.f32 0.5, %v2278
    %v2280 = vsub.f32 1.5, %v2279
    %v2281 = vmul.f32 %v2276, %v2280
    %v2282 = vmul.f32 %v784, %v2281
    %vm2283 = vcmp.eq.f32.partialorder %v784, inf
    %v2284 = vsel %vm2283, %v784, %v2282
    %vm2285 = vcmp.eq.f32.partialorder %v784, 0.0
    %v2286 = vand.u32 %v784, 2147483648
    %v2287 = vsel %vm2285, %v2286, %v2284
    %v2288 = vrsqrt.pop %v785
    %v2289 = vmul.f32 %v2288, %v785
    %v2290 = vmul.f32 %v2289, %v2288
    %v2291 = vmul.f32 0.5, %v2290
    %v2292 = vsub.f32 1.5, %v2291
    %v2293 = vmul.f32 %v2288, %v2292
    %v2294 = vmul.f32 %v785, %v2293
    %vm2295 = vcmp.eq.f32.partialorder %v785, inf
    %v2296 = vsel %vm2295, %v785, %v2294
    %vm2297 = vcmp.eq.f32.partialorder %v785, 0.0
    %v2298 = vand.u32 %v785, 2147483648
    %v2299 = vsel %vm2297, %v2298, %v2296
    %v2300 = vrsqrt.pop %v786
    %v2301 = vmul.f32 %v2300, %v786
    %v2302 = vmul.f32 %v2301, %v2300
    %v2303 = vmul.f32 0.5, %v2302
    %v2304 = vsub.f32 1.5, %v2303
    %v2305 = vmul.f32 %v2300, %v2304
    %v2306 = vmul.f32 %v786, %v2305
    %vm2307 = vcmp.eq.f32.partialorder %v786, inf
    %v2308 = vsel %vm2307, %v786, %v2306
    %vm2309 = vcmp.eq.f32.partialorder %v786, 0.0
    %v2310 = vand.u32 %v786, 2147483648
    %v2311 = vsel %vm2309, %v2310, %v2308
    %v2312 = vrsqrt.pop %v787
    %v2313 = vmul.f32 %v2312, %v787
    %v2314 = vmul.f32 %v2313, %v2312
    %v2315 = vmul.f32 0.5, %v2314
    %v2316 = vsub.f32 1.5, %v2315
    %v2317 = vmul.f32 %v2312, %v2316
    %v2318 = vmul.f32 %v787, %v2317
    %vm2319 = vcmp.eq.f32.partialorder %v787, inf
    %v2320 = vsel %vm2319, %v787, %v2318
    %vm2321 = vcmp.eq.f32.partialorder %v787, 0.0
    %v2322 = vand.u32 %v787, 2147483648
    %v2323 = vsel %vm2321, %v2322, %v2320
    %v2324 = vld [vmem:[%s2] sm:$0xff]
    %v2453 = vlaneseq
    %v2454 = vand.u32 %v2453, 127
    %v2455 = vperm.slane %v799, %v2454
    %v2456 = vadd.s32 %v2454, 4294967288
    %v2457 = vperm.slane %v811, %v2456
    %vm2458 = vcmask 130112
    %v2459 = vsel %vm2458, %v2457, %v2455
    %v2460 = vadd.s32 %v2454, 4294967280
    %v2461 = vperm.slane %v823, %v2460
    %vm2462 = vcmask 195712
    %v2463 = vsel %vm2462, %v2461, %v2459
    %v2464 = vadd.s32 %v2454, 4294967272
    %v2465 = vperm.slane %v835, %v2464
    %vm2466 = vcmask 261312
    %v2467 = vsel %vm2466, %v2465, %v2463
    %v2468 = vadd.s32 %v2454, 4294967264
    %v2469 = vperm.slane %v847, %v2468
    %vm2470 = vcmask 326912
    %v2471 = vsel %vm2470, %v2469, %v2467
    %v2472 = vadd.s32 %v2454, 4294967256
    %v2473 = vperm.slane %v859, %v2472
    %vm2474 = vcmask 392512
    %v2475 = vsel %vm2474, %v2473, %v2471
    %v2476 = vadd.s32 %v2454, 4294967248
    %v2477 = vperm.slane %v871, %v2476
    %vm2478 = vcmask 458112
    %v2479 = vsel %vm2478, %v2477, %v2475
    %v2480 = vadd.s32 %v2454, 4294967240
    %v2481 = vperm.slane %v883, %v2480
    %vm2482 = vcmask 523712
    %v2483 = vsel %vm2482, %v2481, %v2479
    %v2484 = vadd.s32 %v2454, 4294967232
    %v2485 = vperm.slane %v895, %v2484
    %vm2486 = vcmask 589312
    %v2487 = vsel %vm2486, %v2485, %v2483
    %v2488 = vadd.s32 %v2454, 4294967224
    %v2489 = vperm.slane %v907, %v2488
    %vm2490 = vcmask 654912
    %v2491 = vsel %vm2490, %v2489, %v2487
    %v2492 = vadd.s32 %v2454, 4294967216
    %v2493 = vperm.slane %v919, %v2492
    %vm2494 = vcmask 720512
    %v2495 = vsel %vm2494, %v2493, %v2491
    %v2496 = vadd.s32 %v2454, 4294967208
    %v2497 = vperm.slane %v931, %v2496
    %vm2498 = vcmask 786112
    %v2499 = vsel %vm2498, %v2497, %v2495
    %v2500 = vadd.s32 %v2454, 4294967200
    %v2501 = vperm.slane %v943, %v2500
    %vm2502 = vcmask 851712
    %v2503 = vsel %vm2502, %v2501, %v2499
    %v2504 = vadd.s32 %v2454, 4294967192
    %v2505 = vperm.slane %v955, %v2504
    %vm2506 = vcmask 917312
    %v2507 = vsel %vm2506, %v2505, %v2503
    %v2508 = vadd.s32 %v2454, 4294967184
    %v2509 = vperm.slane %v967, %v2508
    %vm2510 = vcmask 982912
    %v2511 = vsel %vm2510, %v2509, %v2507
    %v2512 = vadd.s32 %v2454, 4294967176
    %v2513 = vperm.slane %v979, %v2512
    %vm2514 = vcmask 1048512
    %v2515 = vsel %vm2514, %v2513, %v2511
    %v2516 = vperm.slane %v991, %v2454
    %v2517 = vperm.slane %v1003, %v2456
    %v2518 = vsel %vm2458, %v2517, %v2516
    %v2519 = vperm.slane %v1015, %v2460
    %v2520 = vsel %vm2462, %v2519, %v2518
    %v2521 = vperm.slane %v1027, %v2464
    %v2522 = vsel %vm2466, %v2521, %v2520
    %v2523 = vperm.slane %v1039, %v2468
    %v2524 = vsel %vm2470, %v2523, %v2522
    %v2525 = vperm.slane %v1051, %v2472
    %v2526 = vsel %vm2474, %v2525, %v2524
    %v2527 = vperm.slane %v1063, %v2476
    %v2528 = vsel %vm2478, %v2527, %v2526
    %v2529 = vperm.slane %v1075, %v2480
    %v2530 = vsel %vm2482, %v2529, %v2528
    %v2531 = vperm.slane %v1087, %v2484
    %v2532 = vsel %vm2486, %v2531, %v2530
    %v2533 = vperm.slane %v1099, %v2488
    %v2534 = vsel %vm2490, %v2533, %v2532
    %v2535 = vperm.slane %v1111, %v2492
    %v2536 = vsel %vm2494, %v2535, %v2534
    %v2537 = vperm.slane %v1123, %v2496
    %v2538 = vsel %vm2498, %v2537, %v2536
    %v2539 = vperm.slane %v1135, %v2500
    %v2540 = vsel %vm2502, %v2539, %v2538
    %v2541 = vperm.slane %v1147, %v2504
    %v2542 = vsel %vm2506, %v2541, %v2540
    %v2543 = vperm.slane %v1159, %v2508
    %v2544 = vsel %vm2510, %v2543, %v2542
    %v2545 = vperm.slane %v1171, %v2512
    %v2546 = vsel %vm2514, %v2545, %v2544
    %v2547 = vperm.slane %v1183, %v2454
    %v2548 = vperm.slane %v1195, %v2456
    %v2549 = vsel %vm2458, %v2548, %v2547
    %v2550 = vperm.slane %v1207, %v2460
    %v2551 = vsel %vm2462, %v2550, %v2549
    %v2552 = vperm.slane %v1219, %v2464
    %v2553 = vsel %vm2466, %v2552, %v2551
    %v2554 = vperm.slane %v1231, %v2468
    %v2555 = vsel %vm2470, %v2554, %v2553
    %v2556 = vperm.slane %v1243, %v2472
    %v2557 = vsel %vm2474, %v2556, %v2555
    %v2558 = vperm.slane %v1255, %v2476
    %v2559 = vsel %vm2478, %v2558, %v2557
    %v2560 = vperm.slane %v1267, %v2480
    %v2561 = vsel %vm2482, %v2560, %v2559
    %v2562 = vperm.slane %v1279, %v2484
    %v2563 = vsel %vm2486, %v2562, %v2561
    %v2564 = vperm.slane %v1291, %v2488
    %v2565 = vsel %vm2490, %v2564, %v2563
    %v2566 = vperm.slane %v1303, %v2492
    %v2567 = vsel %vm2494, %v2566, %v2565
    %v2568 = vperm.slane %v1315, %v2496
    %v2569 = vsel %vm2498, %v2568, %v2567
    %v2570 = vperm.slane %v1327, %v2500
    %v2571 = vsel %vm2502, %v2570, %v2569
    %v2572 = vperm.slane %v1339, %v2504
    %v2573 = vsel %vm2506, %v2572, %v2571
    %v2574 = vperm.slane %v1351, %v2508
    %v2575 = vsel %vm2510, %v2574, %v2573
    %v2576 = vperm.slane %v1363, %v2512
    %v2577 = vsel %vm2514, %v2576, %v2575
    %v2578 = vperm.slane %v1375, %v2454
    %v2579 = vperm.slane %v1387, %v2456
    %v2580 = vsel %vm2458, %v2579, %v2578
    %v2581 = vperm.slane %v1399, %v2460
    %v2582 = vsel %vm2462, %v2581, %v2580
    %v2583 = vperm.slane %v1411, %v2464
    %v2584 = vsel %vm2466, %v2583, %v2582
    %v2585 = vperm.slane %v1423, %v2468
    %v2586 = vsel %vm2470, %v2585, %v2584
    %v2587 = vperm.slane %v1435, %v2472
    %v2588 = vsel %vm2474, %v2587, %v2586
    %v2589 = vperm.slane %v1447, %v2476
    %v2590 = vsel %vm2478, %v2589, %v2588
    %v2591 = vperm.slane %v1459, %v2480
    %v2592 = vsel %vm2482, %v2591, %v2590
    %v2593 = vperm.slane %v1471, %v2484
    %v2594 = vsel %vm2486, %v2593, %v2592
    %v2595 = vperm.slane %v1483, %v2488
    %v2596 = vsel %vm2490, %v2595, %v2594
    %v2597 = vperm.slane %v1495, %v2492
    %v2598 = vsel %vm2494, %v2597, %v2596
    %v2599 = vperm.slane %v1507, %v2496
    %v2600 = vsel %vm2498, %v2599, %v2598
    %v2601 = vperm.slane %v1519, %v2500
    %v2602 = vsel %vm2502, %v2601, %v2600
    %v2603 = vperm.slane %v1531, %v2504
    %v2604 = vsel %vm2506, %v2603, %v2602
    %v2605 = vperm.slane %v1543, %v2508
    %v2606 = vsel %vm2510, %v2605, %v2604
    %v2607 = vperm.slane %v1555, %v2512
    %v2608 = vsel %vm2514, %v2607, %v2606
    %v2609 = vperm.slane %v1567, %v2454
    %v2610 = vperm.slane %v1579, %v2456
    %v2611 = vsel %vm2458, %v2610, %v2609
    %v2612 = vperm.slane %v1591, %v2460
    %v2613 = vsel %vm2462, %v2612, %v2611
    %v2614 = vperm.slane %v1603, %v2464
    %v2615 = vsel %vm2466, %v2614, %v2613
    %v2616 = vperm.slane %v1615, %v2468
    %v2617 = vsel %vm2470, %v2616, %v2615
    %v2618 = vperm.slane %v1627, %v2472
    %v2619 = vsel %vm2474, %v2618, %v2617
    %v2620 = vperm.slane %v1639, %v2476
    %v2621 = vsel %vm2478, %v2620, %v2619
    %v2622 = vperm.slane %v1651, %v2480
    %v2623 = vsel %vm2482, %v2622, %v2621
    %v2624 = vperm.slane %v1663, %v2484
    %v2625 = vsel %vm2486, %v2624, %v2623
    %v2626 = vperm.slane %v1675, %v2488
    %v2627 = vsel %vm2490, %v2626, %v2625
    %v2628 = vperm.slane %v1687, %v2492
    %v2629 = vsel %vm2494, %v2628, %v2627
    %v2630 = vperm.slane %v1699, %v2496
    %v2631 = vsel %vm2498, %v2630, %v2629
    %v2632 = vperm.slane %v1711, %v2500
    %v2633 = vsel %vm2502, %v2632, %v2631
    %v2634 = vperm.slane %v1723, %v2504
    %v2635 = vsel %vm2506, %v2634, %v2633
    %v2636 = vperm.slane %v1735, %v2508
    %v2637 = vsel %vm2510, %v2636, %v2635
    %v2638 = vperm.slane %v1747, %v2512
    %v2639 = vsel %vm2514, %v2638, %v2637
    %v2640 = vperm.slane %v1759, %v2454
    %v2641 = vperm.slane %v1771, %v2456
    %v2642 = vsel %vm2458, %v2641, %v2640
    %v2643 = vperm.slane %v1783, %v2460
    %v2644 = vsel %vm2462, %v2643, %v2642
    %v2645 = vperm.slane %v1795, %v2464
    %v2646 = vsel %vm2466, %v2645, %v2644
    %v2647 = vperm.slane %v1807, %v2468
    %v2648 = vsel %vm2470, %v2647, %v2646
    %v2649 = vperm.slane %v1819, %v2472
    %v2650 = vsel %vm2474, %v2649, %v2648
    %v2651 = vperm.slane %v1831, %v2476
    %v2652 = vsel %vm2478, %v2651, %v2650
    %v2653 = vperm.slane %v1843, %v2480
    %v2654 = vsel %vm2482, %v2653, %v2652
    %v2655 = vperm.slane %v1855, %v2484
    %v2656 = vsel %vm2486, %v2655, %v2654
    %v2657 = vperm.slane %v1867, %v2488
    %v2658 = vsel %vm2490, %v2657, %v2656
    %v2659 = vperm.slane %v1879, %v2492
    %v2660 = vsel %vm2494, %v2659, %v2658
    %v2661 = vperm.slane %v1891, %v2496
    %v2662 = vsel %vm2498, %v2661, %v2660
    %v2663 = vperm.slane %v1903, %v2500
    %v2664 = vsel %vm2502, %v2663, %v2662
    %v2665 = vperm.slane %v1915, %v2504
    %v2666 = vsel %vm2506, %v2665, %v2664
    %v2667 = vperm.slane %v1927, %v2508
    %v2668 = vsel %vm2510, %v2667, %v2666
    %v2669 = vperm.slane %v1939, %v2512
    %v2670 = vsel %vm2514, %v2669, %v2668
    %v2671 = vperm.slane %v1951, %v2454
    %v2672 = vperm.slane %v1963, %v2456
    %v2673 = vsel %vm2458, %v2672, %v2671
    %v2674 = vperm.slane %v1975, %v2460
    %v2675 = vsel %vm2462, %v2674, %v2673
    %v2676 = vperm.slane %v1987, %v2464
    %v2677 = vsel %vm2466, %v2676, %v2675
    %v2678 = vperm.slane %v1999, %v2468
    %v2679 = vsel %vm2470, %v2678, %v2677
    %v2680 = vperm.slane %v2011, %v2472
    %v2681 = vsel %vm2474, %v2680, %v2679
    %v2682 = vperm.slane %v2023, %v2476
    %v2683 = vsel %vm2478, %v2682, %v2681
    %v2684 = vperm.slane %v2035, %v2480
    %v2685 = vsel %vm2482, %v2684, %v2683
    %v2686 = vperm.slane %v2047, %v2484
    %v2687 = vsel %vm2486, %v2686, %v2685
    %v2688 = vperm.slane %v2059, %v2488
    %v2689 = vsel %vm2490, %v2688, %v2687
    %v2690 = vperm.slane %v2071, %v2492
    %v2691 = vsel %vm2494, %v2690, %v2689
    %v2692 = vperm.slane %v2083, %v2496
    %v2693 = vsel %vm2498, %v2692, %v2691
    %v2694 = vperm.slane %v2095, %v2500
    %v2695 = vsel %vm2502, %v2694, %v2693
    %v2696 = vperm.slane %v2107, %v2504
    %v2697 = vsel %vm2506, %v2696, %v2695
    %v2698 = vperm.slane %v2119, %v2508
    %v2699 = vsel %vm2510, %v2698, %v2697
    %v2700 = vperm.slane %v2131, %v2512
    %v2701 = vsel %vm2514, %v2700, %v2699
    %v2702 = vperm.slane %v2143, %v2454
    %v2703 = vperm.slane %v2155, %v2456
    %v2704 = vsel %vm2458, %v2703, %v2702
    %v2705 = vperm.slane %v2167, %v2460
    %v2706 = vsel %vm2462, %v2705, %v2704
    %v2707 = vperm.slane %v2179, %v2464
    %v2708 = vsel %vm2466, %v2707, %v2706
    %v2709 = vperm.slane %v2191, %v2468
    %v2710 = vsel %vm2470, %v2709, %v2708
    %v2711 = vperm.slane %v2203, %v2472
    %v2712 = vsel %vm2474, %v2711, %v2710
    %v2713 = vperm.slane %v2215, %v2476
    %v2714 = vsel %vm2478, %v2713, %v2712
    %v2715 = vperm.slane %v2227, %v2480
    %v2716 = vsel %vm2482, %v2715, %v2714
    %v2717 = vperm.slane %v2239, %v2484
    %v2718 = vsel %vm2486, %v2717, %v2716
    %v2719 = vperm.slane %v2251, %v2488
    %v2720 = vsel %vm2490, %v2719, %v2718
    %v2721 = vperm.slane %v2263, %v2492
    %v2722 = vsel %vm2494, %v2721, %v2720
    %v2723 = vperm.slane %v2275, %v2496
    %v2724 = vsel %vm2498, %v2723, %v2722
    %v2725 = vperm.slane %v2287, %v2500
    %v2726 = vsel %vm2502, %v2725, %v2724
    %v2727 = vperm.slane %v2299, %v2504
    %v2728 = vsel %vm2506, %v2727, %v2726
    %v2729 = vperm.slane %v2311, %v2508
    %v2730 = vsel %vm2510, %v2729, %v2728
    %v2731 = vperm.slane %v2323, %v2512
    %v2732 = vsel %vm2514, %v2731, %v2730
    %vm2733 = vcmask 1041409
    %v2734 = vsel %vm2733, %v2546, %v2515
    %vm2735 = vcmask 1042434
    %v2736 = vsel %vm2735, %v2577, %v2734
    %vm2737 = vcmask 1043459
    %v2738 = vsel %vm2737, %v2608, %v2736
    %vm2739 = vcmask 1044484
    %v2740 = vsel %vm2739, %v2639, %v2738
    %vm2741 = vcmask 1045509
    %v2742 = vsel %vm2741, %v2670, %v2740
    %vm2743 = vcmask 1046534
    %v2744 = vsel %vm2743, %v2701, %v2742
    %vm2745 = vcmask 1047559
    %v2746 = vsel %vm2745, %v2732, %v2744
    %v2748 = vmul.f32 %v2324, %v2746
    %v2877 = vperm.slane %v660, %v2454
    %v2878 = vperm.slane %v661, %v2456
    %v2879 = vsel %vm2458, %v2878, %v2877
    %v2880 = vperm.slane %v662, %v2460
    %v2881 = vsel %vm2462, %v2880, %v2879
    %v2882 = vperm.slane %v663, %v2464
    %v2883 = vsel %vm2466, %v2882, %v2881
    %v2884 = vperm.slane %v664, %v2468
    %v2885 = vsel %vm2470, %v2884, %v2883
    %v2886 = vperm.slane %v665, %v2472
    %v2887 = vsel %vm2474, %v2886, %v2885
    %v2888 = vperm.slane %v666, %v2476
    %v2889 = vsel %vm2478, %v2888, %v2887
    %v2890 = vperm.slane %v667, %v2480
    %v2891 = vsel %vm2482, %v2890, %v2889
    %v2892 = vperm.slane %v668, %v2484
    %v2893 = vsel %vm2486, %v2892, %v2891
    %v2894 = vperm.slane %v669, %v2488
    %v2895 = vsel %vm2490, %v2894, %v2893
    %v2896 = vperm.slane %v670, %v2492
    %v2897 = vsel %vm2494, %v2896, %v2895
    %v2898 = vperm.slane %v671, %v2496
    %v2899 = vsel %vm2498, %v2898, %v2897
    %v2900 = vperm.slane %v672, %v2500
    %v2901 = vsel %vm2502, %v2900, %v2899
    %v2902 = vperm.slane %v673, %v2504
    %v2903 = vsel %vm2506, %v2902, %v2901
    %v2904 = vperm.slane %v674, %v2508
    %v2905 = vsel %vm2510, %v2904, %v2903
    %v2906 = vperm.slane %v675, %v2512
    %v2907 = vsel %vm2514, %v2906, %v2905
    %v2908 = vperm.slane %v676, %v2454
    %v2909 = vperm.slane %v677, %v2456
    %v2910 = vsel %vm2458, %v2909, %v2908
    %v2911 = vperm.slane %v678, %v2460
    %v2912 = vsel %vm2462, %v2911, %v2910
    %v2913 = vperm.slane %v679, %v2464
    %v2914 = vsel %vm2466, %v2913, %v2912
    %v2915 = vperm.slane %v680, %v2468
    %v2916 = vsel %vm2470, %v2915, %v2914
    %v2917 = vperm.slane %v681, %v2472
    %v2918 = vsel %vm2474, %v2917, %v2916
    %v2919 = vperm.slane %v682, %v2476
    %v2920 = vsel %vm2478, %v2919, %v2918
    %v2921 = vperm.slane %v683, %v2480
    %v2922 = vsel %vm2482, %v2921, %v2920
    %v2923 = vperm.slane %v684, %v2484
    %v2924 = vsel %vm2486, %v2923, %v2922
    %v2925 = vperm.slane %v685, %v2488
    %v2926 = vsel %vm2490, %v2925, %v2924
    %v2927 = vperm.slane %v686, %v2492
    %v2928 = vsel %vm2494, %v2927, %v2926
    %v2929 = vperm.slane %v687, %v2496
    %v2930 = vsel %vm2498, %v2929, %v2928
    %v2931 = vperm.slane %v688, %v2500
    %v2932 = vsel %vm2502, %v2931, %v2930
    %v2933 = vperm.slane %v689, %v2504
    %v2934 = vsel %vm2506, %v2933, %v2932
    %v2935 = vperm.slane %v690, %v2508
    %v2936 = vsel %vm2510, %v2935, %v2934
    %v2937 = vperm.slane %v691, %v2512
    %v2938 = vsel %vm2514, %v2937, %v2936
    %v2939 = vperm.slane %v692, %v2454
    %v2940 = vperm.slane %v693, %v2456
    %v2941 = vsel %vm2458, %v2940, %v2939
    %v2942 = vperm.slane %v694, %v2460
    %v2943 = vsel %vm2462, %v2942, %v2941
    %v2944 = vperm.slane %v695, %v2464
    %v2945 = vsel %vm2466, %v2944, %v2943
    %v2946 = vperm.slane %v696, %v2468
    %v2947 = vsel %vm2470, %v2946, %v2945
    %v2948 = vperm.slane %v697, %v2472
    %v2949 = vsel %vm2474, %v2948, %v2947
    %v2950 = vperm.slane %v698, %v2476
    %v2951 = vsel %vm2478, %v2950, %v2949
    %v2952 = vperm.slane %v699, %v2480
    %v2953 = vsel %vm2482, %v2952, %v2951
    %v2954 = vperm.slane %v700, %v2484
    %v2955 = vsel %vm2486, %v2954, %v2953
    %v2956 = vperm.slane %v701, %v2488
    %v2957 = vsel %vm2490, %v2956, %v2955
    %v2958 = vperm.slane %v702, %v2492
    %v2959 = vsel %vm2494, %v2958, %v2957
    %v2960 = vperm.slane %v703, %v2496
    %v2961 = vsel %vm2498, %v2960, %v2959
    %v2962 = vperm.slane %v704, %v2500
    %v2963 = vsel %vm2502, %v2962, %v2961
    %v2964 = vperm.slane %v705, %v2504
    %v2965 = vsel %vm2506, %v2964, %v2963
    %v2966 = vperm.slane %v706, %v2508
    %v2967 = vsel %vm2510, %v2966, %v2965
    %v2968 = vperm.slane %v707, %v2512
    %v2969 = vsel %vm2514, %v2968, %v2967
    %v2970 = vperm.slane %v708, %v2454
    %v2971 = vperm.slane %v709, %v2456
    %v2972 = vsel %vm2458, %v2971, %v2970
    %v2973 = vperm.slane %v710, %v2460
    %v2974 = vsel %vm2462, %v2973, %v2972
    %v2975 = vperm.slane %v711, %v2464
    %v2976 = vsel %vm2466, %v2975, %v2974
    %v2977 = vperm.slane %v712, %v2468
    %v2978 = vsel %vm2470, %v2977, %v2976
    %v2979 = vperm.slane %v713, %v2472
    %v2980 = vsel %vm2474, %v2979, %v2978
    %v2981 = vperm.slane %v714, %v2476
    %v2982 = vsel %vm2478, %v2981, %v2980
    %v2983 = vperm.slane %v715, %v2480
    %v2984 = vsel %vm2482, %v2983, %v2982
    %v2985 = vperm.slane %v716, %v2484
    %v2986 = vsel %vm2486, %v2985, %v2984
    %v2987 = vperm.slane %v717, %v2488
    %v2988 = vsel %vm2490, %v2987, %v2986
    %v2989 = vperm.slane %v718, %v2492
    %v2990 = vsel %vm2494, %v2989, %v2988
    %v2991 = vperm.slane %v719, %v2496
    %v2992 = vsel %vm2498, %v2991, %v2990
    %v2993 = vperm.slane %v720, %v2500
    %v2994 = vsel %vm2502, %v2993, %v2992
    %v2995 = vperm.slane %v721, %v2504
    %v2996 = vsel %vm2506, %v2995, %v2994
    %v2997 = vperm.slane %v722, %v2508
    %v2998 = vsel %vm2510, %v2997, %v2996
    %v2999 = vperm.slane %v723, %v2512
    %v3000 = vsel %vm2514, %v2999, %v2998
    %v3001 = vperm.slane %v724, %v2454
    %v3002 = vperm.slane %v725, %v2456
    %v3003 = vsel %vm2458, %v3002, %v3001
    %v3004 = vperm.slane %v726, %v2460
    %v3005 = vsel %vm2462, %v3004, %v3003
    %v3006 = vperm.slane %v727, %v2464
    %v3007 = vsel %vm2466, %v3006, %v3005
    %v3008 = vperm.slane %v728, %v2468
    %v3009 = vsel %vm2470, %v3008, %v3007
    %v3010 = vperm.slane %v729, %v2472
    %v3011 = vsel %vm2474, %v3010, %v3009
    %v3012 = vperm.slane %v730, %v2476
    %v3013 = vsel %vm2478, %v3012, %v3011
    %v3014 = vperm.slane %v731, %v2480
    %v3015 = vsel %vm2482, %v3014, %v3013
    %v3016 = vperm.slane %v732, %v2484
    %v3017 = vsel %vm2486, %v3016, %v3015
    %v3018 = vperm.slane %v733, %v2488
    %v3019 = vsel %vm2490, %v3018, %v3017
    %v3020 = vperm.slane %v734, %v2492
    %v3021 = vsel %vm2494, %v3020, %v3019
    %v3022 = vperm.slane %v735, %v2496
    %v3023 = vsel %vm2498, %v3022, %v3021
    %v3024 = vperm.slane %v736, %v2500
    %v3025 = vsel %vm2502, %v3024, %v3023
    %v3026 = vperm.slane %v737, %v2504
    %v3027 = vsel %vm2506, %v3026, %v3025
    %v3028 = vperm.slane %v738, %v2508
    %v3029 = vsel %vm2510, %v3028, %v3027
    %v3030 = vperm.slane %v739, %v2512
    %v3031 = vsel %vm2514, %v3030, %v3029
    %v3032 = vperm.slane %v740, %v2454
    %v3033 = vperm.slane %v741, %v2456
    %v3034 = vsel %vm2458, %v3033, %v3032
    %v3035 = vperm.slane %v742, %v2460
    %v3036 = vsel %vm2462, %v3035, %v3034
    %v3037 = vperm.slane %v743, %v2464
    %v3038 = vsel %vm2466, %v3037, %v3036
    %v3039 = vperm.slane %v744, %v2468
    %v3040 = vsel %vm2470, %v3039, %v3038
    %v3041 = vperm.slane %v745, %v2472
    %v3042 = vsel %vm2474, %v3041, %v3040
    %v3043 = vperm.slane %v746, %v2476
    %v3044 = vsel %vm2478, %v3043, %v3042
    %v3045 = vperm.slane %v747, %v2480
    %v3046 = vsel %vm2482, %v3045, %v3044
    %v3047 = vperm.slane %v748, %v2484
    %v3048 = vsel %vm2486, %v3047, %v3046
    %v3049 = vperm.slane %v749, %v2488
    %v3050 = vsel %vm2490, %v3049, %v3048
    %v3051 = vperm.slane %v750, %v2492
    %v3052 = vsel %vm2494, %v3051, %v3050
    %v3053 = vperm.slane %v751, %v2496
    %v3054 = vsel %vm2498, %v3053, %v3052
    %v3055 = vperm.slane %v752, %v2500
    %v3056 = vsel %vm2502, %v3055, %v3054
    %v3057 = vperm.slane %v753, %v2504
    %v3058 = vsel %vm2506, %v3057, %v3056
    %v3059 = vperm.slane %v754, %v2508
    %v3060 = vsel %vm2510, %v3059, %v3058
    %v3061 = vperm.slane %v755, %v2512
    %v3062 = vsel %vm2514, %v3061, %v3060
    %v3063 = vperm.slane %v756, %v2454
    %v3064 = vperm.slane %v757, %v2456
    %v3065 = vsel %vm2458, %v3064, %v3063
    %v3066 = vperm.slane %v758, %v2460
    %v3067 = vsel %vm2462, %v3066, %v3065
    %v3068 = vperm.slane %v759, %v2464
    %v3069 = vsel %vm2466, %v3068, %v3067
    %v3070 = vperm.slane %v760, %v2468
    %v3071 = vsel %vm2470, %v3070, %v3069
    %v3072 = vperm.slane %v761, %v2472
    %v3073 = vsel %vm2474, %v3072, %v3071
    %v3074 = vperm.slane %v762, %v2476
    %v3075 = vsel %vm2478, %v3074, %v3073
    %v3076 = vperm.slane %v763, %v2480
    %v3077 = vsel %vm2482, %v3076, %v3075
    %v3078 = vperm.slane %v764, %v2484
    %v3079 = vsel %vm2486, %v3078, %v3077
    %v3080 = vperm.slane %v765, %v2488
    %v3081 = vsel %vm2490, %v3080, %v3079
    %v3082 = vperm.slane %v766, %v2492
    %v3083 = vsel %vm2494, %v3082, %v3081
    %v3084 = vperm.slane %v767, %v2496
    %v3085 = vsel %vm2498, %v3084, %v3083
    %v3086 = vperm.slane %v768, %v2500
    %v3087 = vsel %vm2502, %v3086, %v3085
    %v3088 = vperm.slane %v769, %v2504
    %v3089 = vsel %vm2506, %v3088, %v3087
    %v3090 = vperm.slane %v770, %v2508
    %v3091 = vsel %vm2510, %v3090, %v3089
    %v3092 = vperm.slane %v771, %v2512
    %v3093 = vsel %vm2514, %v3092, %v3091
    %v3094 = vperm.slane %v772, %v2454
    %v3095 = vperm.slane %v773, %v2456
    %v3096 = vsel %vm2458, %v3095, %v3094
    %v3097 = vperm.slane %v774, %v2460
    %v3098 = vsel %vm2462, %v3097, %v3096
    %v3099 = vperm.slane %v775, %v2464
    %v3100 = vsel %vm2466, %v3099, %v3098
    %v3101 = vperm.slane %v776, %v2468
    %v3102 = vsel %vm2470, %v3101, %v3100
    %v3103 = vperm.slane %v777, %v2472
    %v3104 = vsel %vm2474, %v3103, %v3102
    %v3105 = vperm.slane %v778, %v2476
    %v3106 = vsel %vm2478, %v3105, %v3104
    %v3107 = vperm.slane %v779, %v2480
    %v3108 = vsel %vm2482, %v3107, %v3106
    %v3109 = vperm.slane %v780, %v2484
    %v3110 = vsel %vm2486, %v3109, %v3108
    %v3111 = vperm.slane %v781, %v2488
    %v3112 = vsel %vm2490, %v3111, %v3110
    %v3113 = vperm.slane %v782, %v2492
    %v3114 = vsel %vm2494, %v3113, %v3112
    %v3115 = vperm.slane %v783, %v2496
    %v3116 = vsel %vm2498, %v3115, %v3114
    %v3117 = vperm.slane %v784, %v2500
    %v3118 = vsel %vm2502, %v3117, %v3116
    %v3119 = vperm.slane %v785, %v2504
    %v3120 = vsel %vm2506, %v3119, %v3118
    %v3121 = vperm.slane %v786, %v2508
    %v3122 = vsel %vm2510, %v3121, %v3120
    %v3123 = vperm.slane %v787, %v2512
    %v3124 = vsel %vm2514, %v3123, %v3122
    %v3125 = vsel %vm2733, %v2938, %v2907
    %v3126 = vsel %vm2735, %v2969, %v3125
    %v3127 = vsel %vm2737, %v3000, %v3126
    %v3128 = vsel %vm2739, %v3031, %v3127
    %v3129 = vsel %vm2741, %v3062, %v3128
    %v3130 = vsel %vm2743, %v3093, %v3129
    %v3131 = vsel %vm2745, %v3124, %v3130
    %v3133 = vadd.f32 %v2748, %v3131
    %3134 = vst [vmem:[#allocation2] sm:$0xff] %v3133
    // Predicated region
    $region14: #{tpu_custom_call.1} parent=1 // pred_check
      _
    $region15: #{tpu_custom_call.1} parent=1 // pred_check_branch
      %3136 = sbr.rel (0) target = $region17
    $region16: #{tpu_custom_call.1} parent=1 // pred_region
      %3138 = vsyncadd [#allocation3], 0
      %s3140 = sshll.u32 [#allocation2], 4
      %s3141 = int_to_ptr.vmem [resolvable:$true] %s3140
      %s3142 = sshll.u32 %s3, 4
      %s3143 = int_to_ptr.hbm [resolvable:$true] %s3142
      %3145 = dma.vmem_to_hbm [thread:$0]  %s3141, 128, %s3143, [#allocation3]
    $region17: #{tpu_custom_call.1} parent=1 // pred_fallthru
      _
    // Predicated region
    $region18: #{tpu_custom_call.1} parent=1 // pred_check
      _
    $region19: #{tpu_custom_call.1} parent=1 // pred_check_branch
      %3147 = sbr.rel (0) target = $region21
    $region20: #{tpu_custom_call.1} parent=1 // pred_region
      %3149 = dma.done [#allocation3], 128
    $region21: #{tpu_custom_call.1} parent=1 // pred_fallthru
      _
    %3150 = vsyncpa [#allocation3], 1

</llo_original>
